<compile_context>
chip_gen: v6e
topology: v6e:2x2x1
jax: 0.10.0
libtpu: 0.0.40
codegen_flags: <defaults>
</compile_context>

<pallas_src>
import functools

import jax
import jax.numpy as jnp
import numpy as np
from jax.experimental import pallas as pl
from jax.experimental.pallas import tpu as pltpu


def _round_up(x, m):
    return (x + m - 1) // m * m


def _sigmoid_tanh(x):
    # sigmoid(x) == 0.5 * (tanh(0.5 * x) + 1): one EUP push instead of exp+recip.
    return 0.5 * (jnp.tanh(0.5 * x) + 1.0)


def _decoder_kernel(num_layers, h_pad, batch_pad,
                    tok_ref,                                      # SMEM (prefetch)
                    emb_hbm, h0_ref, c0_ref, w_ref, b_ref, wout_ref, bout_ref,
                    dist_ref, hN_ref, cN_ref,
                    x_ref, sems):
    """One grid step == one LSTM layer of the single decode timestep."""
    layer = pl.program_id(0)

    @pl.when(layer == 0)
    def _():
        # Fused nn.Embedding gather: one small row DMA per batch element from
        # the HBM-resident table, landing directly in the activation scratch.
        copies = []
        for b in range(batch_pad):
            cp = pltpu.make_async_copy(
                emb_hbm.at[pl.ds(tok_ref[b], 1), :],
                x_ref.at[pl.ds(b, 1), :],
                sems.at[b])
            cp.start()
            copies.append(cp)
        for cp in copies:
            cp.wait()
        # F.relu(embedding(...)) fused.
        x_ref[...] = jnp.maximum(x_ref[...], 0.0)

    x = x_ref[...]                                   # (Bp, Hp)  layer input
    h_prev = h0_ref[...]                             # (Bp, Hp)
    c_prev = c0_ref[...]

    # One fused MXU matmul per layer: [x, h] @ [W_ih^T ; W_hh^T]  -> (Bp, 4*Hp)
    xh = jnp.concatenate([x, h_prev], axis=-1).astype(w_ref.dtype)
    gates = (jnp.dot(xh, w_ref[...], preferred_element_type=jnp.float32)
             + b_ref[...])

    # gate order i, f, g, o; slices are 128-lane aligned (Hp % 128 == 0)
    i_g = _sigmoid_tanh(gates[:, 0 * h_pad:1 * h_pad])
    f_g = _sigmoid_tanh(gates[:, 1 * h_pad:2 * h_pad])
    g_g = jnp.tanh(gates[:, 2 * h_pad:3 * h_pad])
    o_g = _sigmoid_tanh(gates[:, 3 * h_pad:4 * h_pad])

    c_new = f_g * c_prev + i_g * g_g
    h_new = o_g * jnp.tanh(c_new)

    hN_ref[...] = h_new                              # per-layer output block
    cN_ref[...] = c_new
    x_ref[...] = h_new                               # carry to next layer

    @pl.when(layer == num_layers - 1)
    def _():
        # Output projection + log-softmax.  Padded vocab lanes carry a -1e30
        # bias, so they never win the max and their exp underflows to 0.
        logits = (jnp.dot(h_new.astype(wout_ref.dtype), wout_ref[...],
                          preferred_element_type=jnp.float32)
                  + bout_ref[...])                   # (Bp, Vp)
        m = jnp.max(logits, axis=-1, keepdims=True)
        e = jnp.exp(logits - m)
        lse = m + jnp.log(jnp.sum(e, axis=-1, keepdims=True))
        dist_ref[...] = logits - lse


def _vmem_limit_bytes(L, Bp, Hp, Vp, w_bytes):
    """Scoped-VMEM request sized from the actual pipelined buffer footprint."""
    per_layer_w = (2 * Hp) * (4 * Hp) * w_bytes + (4 * Hp) * 4
    state_blk = Bp * Hp * 4
    footprint = (2 * per_layer_w          # layer weights + bias, double-buffered
                 + 2 * 4 * state_blk      # h0/c0/hN/cN per-layer blocks, x2 bufs
                 + Hp * Vp * w_bytes + Vp * 4   # W_out / b_out, single-buffered
                 + 2 * Bp * Vp * 4        # log-prob output block
                 + state_blk)             # activation carry scratch
    return int(min(max(2 * footprint, 32 * 1024 * 1024), 64 * 1024 * 1024))


def decoder_forward_pallas(tokens_p, emb_padded, h0_p, c0_p, w_fused, b_fused,
                           wout_p, bout_p):
    """tokens_p: (Bp,) int32; emb_padded: (V,Hp) f32 (HBM); h0/c0: (L,Bp,Hp) f32;
    w_fused: (L,2Hp,4Hp); b_fused: (L,1,4Hp) f32; wout_p: (Hp,Vp); bout_p: (1,Vp).
    Hp, Vp are multiples of 128; Bp a multiple of 8."""
    L, Bp, Hp = h0_p.shape
    Vp = wout_p.shape[1]

    kernel = functools.partial(_decoder_kernel, L, Hp, Bp)

    grid_spec = pltpu.PrefetchScalarGridSpec(
        num_scalar_prefetch=1,                        # token ids -> SMEM
        grid=(L,),                                    # one step per LSTM layer
        in_specs=[
            pl.BlockSpec(memory_space=pl.ANY),                           # emb (HBM)
            pl.BlockSpec((None, Bp, Hp), lambda l, tok: (l, 0, 0)),      # h0[l]
            pl.BlockSpec((None, Bp, Hp), lambda l, tok: (l, 0, 0)),      # c0[l]
            pl.BlockSpec((None, 2 * Hp, 4 * Hp), lambda l, tok: (l, 0, 0)),  # W[l]
            pl.BlockSpec((None, 1, 4 * Hp), lambda l, tok: (l, 0, 0)),   # bias[l]
            pl.BlockSpec((Hp, Vp), lambda l, tok: (0, 0),
                         pipeline_mode=pl.Buffered(1)),                  # W_out^T
            pl.BlockSpec((1, Vp), lambda l, tok: (0, 0),
                         pipeline_mode=pl.Buffered(1)),                  # b_out
        ],
        out_specs=[
            pl.BlockSpec((Bp, Vp), lambda l, tok: (0, 0)),               # log-probs
            pl.BlockSpec((None, Bp, Hp), lambda l, tok: (l, 0, 0)),      # h_n[l]
            pl.BlockSpec((None, Bp, Hp), lambda l, tok: (l, 0, 0)),      # c_n[l]
        ],
        scratch_shapes=[
            pltpu.VMEM((Bp, Hp), jnp.float32),        # inter-layer activation carry
            pltpu.SemaphoreType.DMA((Bp,)),           # per-row embedding-gather sems
        ],
    )

    dist, h_n, c_n = pl.pallas_call(
        kernel,
        out_shape=(jax.ShapeDtypeStruct((Bp, Vp), jnp.float32),
                   jax.ShapeDtypeStruct((L, Bp, Hp), jnp.float32),
                   jax.ShapeDtypeStruct((L, Bp, Hp), jnp.float32)),
        grid_spec=grid_spec,
        compiler_params=pltpu.CompilerParams(
            dimension_semantics=("arbitrary",),       # layers are sequential
            vmem_limit_bytes=_vmem_limit_bytes(L, Bp, Hp, Vp,
                                               w_fused.dtype.itemsize)),
    )(tokens_p, emb_padded, h0_p, c0_p, w_fused, b_fused, wout_p, bout_p)
    return dist, h_n, c_n


@jax.jit
def _decoder_step(tokens, hidden, cell, emb_padded, w_fused, b_fused,
                  wout_p, bout_p):
    """Single jitted dispatch: pad glue + fused kernel + output slicing."""
    B = tokens.shape[0]
    L, _, H = hidden.shape
    V, Hp = emb_padded.shape
    Bp = _round_up(max(B, 8), 8)

    tokens_p = jnp.pad(tokens.astype(jnp.int32), (0, Bp - B))
    h0_p = jnp.pad(hidden.astype(jnp.float32),
                   ((0, 0), (0, Bp - B), (0, Hp - H)))
    c0_p = jnp.pad(cell.astype(jnp.float32),
                   ((0, 0), (0, Bp - B), (0, Hp - H)))

    dist, h_n, c_n = decoder_forward_pallas(
        tokens_p, emb_padded, h0_p, c0_p, w_fused, b_fused, wout_p, bout_p)

    token_dist = dist[:B, :V][None]                   # (1, B, V)
    return token_dist, h_n[:, :B, :H], c_n[:, :B, :H]


class DecoderRNNPallas:
    """JAX/Pallas equivalent of coq2vec.DecoderRNN.forward."""

    def __init__(self, hidden_size, output_size, num_layers=1, key=None,
                 param_dtype=jnp.float32):
        self.hidden_size = hidden_size
        self.output_size = output_size
        self.num_layers = num_layers
        if key is None:
            key = jax.random.PRNGKey(0)

        H, V, L = hidden_size, output_size, num_layers
        k_emb, key = jax.random.split(key)
        # nn.Embedding: N(0, 1)
        self.embedding = jax.random.normal(k_emb, (V, H), jnp.float32)

        # nn.LSTM / nn.Linear: U(-1/sqrt(H), 1/sqrt(H))
        bound = 1.0 / np.sqrt(H)
        self.lstm_params = []
        for _ in range(L):
            k1, k2, k3, k4, key = jax.random.split(key, 5)
            w_ih = jax.random.uniform(k1, (4 * H, H), jnp.float32, -bound, bound)
            w_hh = jax.random.uniform(k2, (4 * H, H), jnp.float32, -bound, bound)
            b_ih = jax.random.uniform(k3, (4 * H,), jnp.float32, -bound, bound)
            b_hh = jax.random.uniform(k4, (4 * H,), jnp.float32, -bound, bound)
            self.lstm_params.append((w_ih, w_hh, b_ih, b_hh))
        k5, k6, key = jax.random.split(key, 3)
        self.w_out = jax.random.uniform(k5, (V, H), jnp.float32, -bound, bound)
        self.b_out = jax.random.uniform(k6, (V,), jnp.float32, -bound, bound)

        # ---- precompute fused, lane-dense (128-padded) device parameters ----
        self.h_pad = _round_up(H, 128)
        self.v_pad = _round_up(V, 128)
        Hp, Vp = self.h_pad, self.v_pad

        def pad_gate_cols(w):
            # (R, 4H) -> (R, 4*Hp): pad each of the 4 gate blocks independently
            r = w.shape[0]
            w4 = w.reshape(r, 4, H)
            return jnp.pad(w4, ((0, 0), (0, 0), (0, Hp - H))).reshape(r, 4 * Hp)

        ws, bs = [], []
        for (w_ih, w_hh, b_ih, b_hh) in self.lstm_params:
            wih_t = jnp.pad(pad_gate_cols(w_ih.T), ((0, Hp - H), (0, 0)))  # (Hp,4Hp)
            whh_t = jnp.pad(pad_gate_cols(w_hh.T), ((0, Hp - H), (0, 0)))  # (Hp,4Hp)
            ws.append(jnp.concatenate([wih_t, whh_t], axis=0))             # (2Hp,4Hp)
            bs.append(pad_gate_cols((b_ih + b_hh).reshape(1, 4 * H)))      # (1,4Hp)
        self.w_fused = jnp.stack(ws).astype(param_dtype)                   # (L,2Hp,4Hp)
        self.b_fused = jnp.stack(bs).astype(jnp.float32)                   # (L,1,4Hp)

        # Embedding table stays in HBM; rows are gathered by the kernel.
        self.emb_padded = jnp.pad(self.embedding, ((0, 0), (0, Hp - H)))   # (V,Hp)
        self.wout_padded = jnp.pad(self.w_out.T,
                                   ((0, Hp - H), (0, Vp - V))).astype(param_dtype)
        # -1e30 in padded vocab columns replaces the in-kernel iota/where mask.
        self.bout_padded = jnp.pad(self.b_out.reshape(1, V),
                                   ((0, 0), (0, Vp - V)),
                                   constant_values=-1e30).astype(jnp.float32)

    def init_hidden(self, batch_size):
        return jnp.zeros((self.num_layers, batch_size, self.hidden_size),
                         jnp.float32)

    def init_cell(self, batch_size):
        return jnp.zeros((self.num_layers, batch_size, self.hidden_size),
                         jnp.float32)

    def __call__(self, tokens, hidden, cell):
        """tokens: (B,) int; hidden/cell: (L,B,H).
        Returns (token_dist (1,B,V), hidden (L,B,H), cell (L,B,H))."""
        return _decoder_step(tokens, hidden, cell, self.emb_padded,
                             self.w_fused, self.b_fused,
                             self.wout_padded, self.bout_padded)


# ----------------------------------------------------------------------------
# Pure numpy reference (mirrors the PyTorch DecoderRNN.forward semantics).
# ----------------------------------------------------------------------------
def _ref_forward(tokens, hidden, cell, embedding, lstm_params, w_out, b_out):
    def sig(z):
        return 1.0 / (1.0 + np.exp(-z))

    emb = np.asarray(embedding, np.float64)[np.asarray(tokens)]        # (B, H)
    x = np.maximum(emb, 0.0)
    L = len(lstm_params)
    B, H = x.shape
    h_out = np.zeros((L, B, H))
    c_out = np.zeros((L, B, H))
    for l, (w_ih, w_hh, b_ih, b_hh) in enumerate(lstm_params):
        w_ih = np.asarray(w_ih, np.float64)
        w_hh = np.asarray(w_hh, np.float64)
        b = np.asarray(b_ih, np.float64) + np.asarray(b_hh, np.float64)
        h = np.asarray(hidden[l], np.float64)
        c = np.asarray(cell[l], np.float64)
        g = x @ w_ih.T + h @ w_hh.T + b
        i_g, f_g = sig(g[:, :H]), sig(g[:, H:2 * H])
        g_g, o_g = np.tanh(g[:, 2 * H:3 * H]), sig(g[:, 3 * H:])
        c_new = f_g * c + i_g * g_g
        h_new = o_g * np.tanh(c_new)
        h_out[l] = h_new
        c_out[l] = c_new
        x = h_new
    logits = x @ np.asarray(w_out, np.float64).T + np.asarray(b_out, np.float64)
    m = logits.max(axis=-1, keepdims=True)
    lse = m + np.log(np.exp(logits - m).sum(axis=-1, keepdims=True))
    return (logits - lse)[None], h_out, c_out


if __name__ == "__main__":
    H, V, L = 32, 64, 2          # hidden_size, output_size (vocab), num_layers
    B = 8                        # batch

    key = jax.random.PRNGKey(0)
    k_tok, k_param, k_h, k_c = jax.random.split(key, 4)

    dec = DecoderRNNPallas(H, V, num_layers=L, key=k_param)

    tokens = jax.random.randint(k_tok, (B,), 0, V, dtype=jnp.int32)
    # non-zero initial state to exercise the recurrent path
    hidden = 0.1 * jax.random.normal(k_h, (L, B, H), jnp.float32)
    cell = 0.1 * jax.random.normal(k_c, (L, B, H), jnp.float32)

    token_dist, h_n, c_n = dec(tokens, hidden, cell)
    token_dist = jax.block_until_ready(token_dist)
    h_n = jax.block_until_ready(h_n)
    c_n = jax.block_until_ready(c_n)

    ref_dist, ref_h, ref_c = _ref_forward(
        np.asarray(tokens), np.asarray(hidden), np.asarray(cell),
        np.asarray(dec.embedding),
        [tuple(np.asarray(p) for p in ps) for ps in dec.lstm_params],
        np.asarray(dec.w_out), np.asarray(dec.b_out))

    np.testing.assert_allclose(np.asarray(token_dist), ref_dist,
                               rtol=1e-4, atol=1e-4)
    np.testing.assert_allclose(np.asarray(h_n), ref_h, rtol=1e-4, atol=1e-4)
    np.testing.assert_allclose(np.asarray(c_n), ref_c, rtol=1e-4, atol=1e-4)

    print("KERNEL_OK")
</pallas_src>

<mosaic_0001>
module attributes {stable_mosaic.version = 11 : i64} {
  func.func @_decoder_kernel(%arg0: i32, %arg1: memref<8xi32, #tpu.memory_space<smem>>, %arg2: memref<64x128xf32, #tpu.memory_space<any>>, %arg3: memref<1x8x128xf32, #tpu.memory_space<vmem>>, %arg4: memref<1x8x128xf32, #tpu.memory_space<vmem>>, %arg5: memref<1x256x512xf32, #tpu.memory_space<vmem>>, %arg6: memref<1x1x512xf32, #tpu.memory_space<vmem>>, %arg7: memref<128x128xf32, #tpu.memory_space<vmem>>, %arg8: memref<1x128xf32, #tpu.memory_space<vmem>>, %arg9: memref<8x128xf32, #tpu.memory_space<vmem>>, %arg10: memref<1x8x128xf32, #tpu.memory_space<vmem>>, %arg11: memref<1x8x128xf32, #tpu.memory_space<vmem>>, %arg12: memref<8x128xf32, #tpu.memory_space<vmem>>, %arg13: memref<8x!tpu.dma_semaphore, #tpu.memory_space<semaphore_mem>>) attributes {dimension_semantics = [#tpu.dimension_semantics<arbitrary>], iteration_bounds = array<i64: 2>, scalar_prefetch = 1 : i64, scratch_operands = 2 : i64, tpu.core_type = #tpu.core_type<tc>, window_params = [{}, {transform_indices = @transform_1, window_bounds = array<i64: 1, 8, 128>}, {transform_indices = @transform_2, window_bounds = array<i64: 1, 8, 128>}, {transform_indices = @transform_3, window_bounds = array<i64: 1, 256, 512>}, {transform_indices = @transform_4, window_bounds = array<i64: 1, 1, 512>}, {pipeline_mode = #tpu.pipeline_mode<synchronous>, transform_indices = @transform_5, window_bounds = array<i64: 128, 128>}, {pipeline_mode = #tpu.pipeline_mode<synchronous>, transform_indices = @transform_6, window_bounds = array<i64: 1, 128>}, {pipeline_mode = #tpu.pipeline_mode<synchronous>, transform_indices = @transform_7, window_bounds = array<i64: 8, 128>}, {transform_indices = @transform_8, window_bounds = array<i64: 1, 8, 128>}, {transform_indices = @transform_9, window_bounds = array<i64: 1, 8, 128>}]} {
    %c0_i32 = arith.constant 0 : i32
    %0 = arith.cmpi eq, %arg0, %c0_i32 : i32
    %1 = arith.extui %0 : i1 to i32
    %c0_i32_0 = arith.constant 0 : i32
    %2 = arith.cmpi ne, %1, %c0_i32_0 : i32
    scf.if %2 {
      %c0_32 = arith.constant 0 : index
      %57 = memref.load %arg1[%c0_32] : memref<8xi32, #tpu.memory_space<smem>>
      %c0_i32_33 = arith.constant 0 : i32
      %c0_i32_34 = arith.constant 0 : i32
      %58 = tpu.memref_slice %arg2[%57, %c0_i32_34] : memref<64x128xf32, #tpu.memory_space<any>> -> memref<1x128xf32, #tpu.memory_space<any>>
      %c0_i32_35 = arith.constant 0 : i32
      %c0_i32_36 = arith.constant 0 : i32
      %59 = tpu.memref_slice %arg12[%c0_i32_35, %c0_i32_36] : memref<8x128xf32, #tpu.memory_space<vmem>> -> memref<1x128xf32, #tpu.memory_space<vmem>>
      %60 = tpu.memref_slice %arg13[%c0_i32_33] : memref<8x!tpu.dma_semaphore, #tpu.memory_space<semaphore_mem>> -> memref<1x!tpu.dma_semaphore, #tpu.memory_space<semaphore_mem>>
      %61 = tpu.memref_squeeze %60 : memref<1x!tpu.dma_semaphore, #tpu.memory_space<semaphore_mem>> -> memref<!tpu.dma_semaphore, #tpu.memory_space<semaphore_mem>>
      tpu.enqueue_dma source(%58 : memref<1x128xf32, #tpu.memory_space<any>>) target(%59 : memref<1x128xf32, #tpu.memory_space<vmem>>) target_semaphore(%61 : memref<!tpu.dma_semaphore, #tpu.memory_space<semaphore_mem>>)
      %c1 = arith.constant 1 : index
      %62 = memref.load %arg1[%c1] : memref<8xi32, #tpu.memory_space<smem>>
      %c1_i32_37 = arith.constant 1 : i32
      %c0_i32_38 = arith.constant 0 : i32
      %63 = tpu.memref_slice %arg2[%62, %c0_i32_38] : memref<64x128xf32, #tpu.memory_space<any>> -> memref<1x128xf32, #tpu.memory_space<any>>
      %c1_i32_39 = arith.constant 1 : i32
      %c0_i32_40 = arith.constant 0 : i32
      %64 = tpu.memref_slice %arg12[%c1_i32_39, %c0_i32_40] : memref<8x128xf32, #tpu.memory_space<vmem>> -> memref<1x128xf32, #tpu.memory_space<vmem>>
      %65 = tpu.memref_slice %arg13[%c1_i32_37] : memref<8x!tpu.dma_semaphore, #tpu.memory_space<semaphore_mem>> -> memref<1x!tpu.dma_semaphore, #tpu.memory_space<semaphore_mem>>
      %66 = tpu.memref_squeeze %65 : memref<1x!tpu.dma_semaphore, #tpu.memory_space<semaphore_mem>> -> memref<!tpu.dma_semaphore, #tpu.memory_space<semaphore_mem>>
      tpu.enqueue_dma source(%63 : memref<1x128xf32, #tpu.memory_space<any>>) target(%64 : memref<1x128xf32, #tpu.memory_space<vmem>>) target_semaphore(%66 : memref<!tpu.dma_semaphore, #tpu.memory_space<semaphore_mem>>)
      %c2 = arith.constant 2 : index
      %67 = memref.load %arg1[%c2] : memref<8xi32, #tpu.memory_space<smem>>
      %c2_i32 = arith.constant 2 : i32
      %c0_i32_41 = arith.constant 0 : i32
      %68 = tpu.memref_slice %arg2[%67, %c0_i32_41] : memref<64x128xf32, #tpu.memory_space<any>> -> memref<1x128xf32, #tpu.memory_space<any>>
      %c2_i32_42 = arith.constant 2 : i32
      %c0_i32_43 = arith.constant 0 : i32
      %69 = tpu.memref_slice %arg12[%c2_i32_42, %c0_i32_43] : memref<8x128xf32, #tpu.memory_space<vmem>> -> memref<1x128xf32, #tpu.memory_space<vmem>>
      %70 = tpu.memref_slice %arg13[%c2_i32] : memref<8x!tpu.dma_semaphore, #tpu.memory_space<semaphore_mem>> -> memref<1x!tpu.dma_semaphore, #tpu.memory_space<semaphore_mem>>
      %71 = tpu.memref_squeeze %70 : memref<1x!tpu.dma_semaphore, #tpu.memory_space<semaphore_mem>> -> memref<!tpu.dma_semaphore, #tpu.memory_space<semaphore_mem>>
      tpu.enqueue_dma source(%68 : memref<1x128xf32, #tpu.memory_space<any>>) target(%69 : memref<1x128xf32, #tpu.memory_space<vmem>>) target_semaphore(%71 : memref<!tpu.dma_semaphore, #tpu.memory_space<semaphore_mem>>)
      %c3 = arith.constant 3 : index
      %72 = memref.load %arg1[%c3] : memref<8xi32, #tpu.memory_space<smem>>
      %c3_i32 = arith.constant 3 : i32
      %c0_i32_44 = arith.constant 0 : i32
      %73 = tpu.memref_slice %arg2[%72, %c0_i32_44] : memref<64x128xf32, #tpu.memory_space<any>> -> memref<1x128xf32, #tpu.memory_space<any>>
      %c3_i32_45 = arith.constant 3 : i32
      %c0_i32_46 = arith.constant 0 : i32
      %74 = tpu.memref_slice %arg12[%c3_i32_45, %c0_i32_46] : memref<8x128xf32, #tpu.memory_space<vmem>> -> memref<1x128xf32, #tpu.memory_space<vmem>>
      %75 = tpu.memref_slice %arg13[%c3_i32] : memref<8x!tpu.dma_semaphore, #tpu.memory_space<semaphore_mem>> -> memref<1x!tpu.dma_semaphore, #tpu.memory_space<semaphore_mem>>
      %76 = tpu.memref_squeeze %75 : memref<1x!tpu.dma_semaphore, #tpu.memory_space<semaphore_mem>> -> memref<!tpu.dma_semaphore, #tpu.memory_space<semaphore_mem>>
      tpu.enqueue_dma source(%73 : memref<1x128xf32, #tpu.memory_space<any>>) target(%74 : memref<1x128xf32, #tpu.memory_space<vmem>>) target_semaphore(%76 : memref<!tpu.dma_semaphore, #tpu.memory_space<semaphore_mem>>)
      %c4 = arith.constant 4 : index
      %77 = memref.load %arg1[%c4] : memref<8xi32, #tpu.memory_space<smem>>
      %c4_i32 = arith.constant 4 : i32
      %c0_i32_47 = arith.constant 0 : i32
      %78 = tpu.memref_slice %arg2[%77, %c0_i32_47] : memref<64x128xf32, #tpu.memory_space<any>> -> memref<1x128xf32, #tpu.memory_space<any>>
      %c4_i32_48 = arith.constant 4 : i32
      %c0_i32_49 = arith.constant 0 : i32
      %79 = tpu.memref_slice %arg12[%c4_i32_48, %c0_i32_49] : memref<8x128xf32, #tpu.memory_space<vmem>> -> memref<1x128xf32, #tpu.memory_space<vmem>>
      %80 = tpu.memref_slice %arg13[%c4_i32] : memref<8x!tpu.dma_semaphore, #tpu.memory_space<semaphore_mem>> -> memref<1x!tpu.dma_semaphore, #tpu.memory_space<semaphore_mem>>
      %81 = tpu.memref_squeeze %80 : memref<1x!tpu.dma_semaphore, #tpu.memory_space<semaphore_mem>> -> memref<!tpu.dma_semaphore, #tpu.memory_space<semaphore_mem>>
      tpu.enqueue_dma source(%78 : memref<1x128xf32, #tpu.memory_space<any>>) target(%79 : memref<1x128xf32, #tpu.memory_space<vmem>>) target_semaphore(%81 : memref<!tpu.dma_semaphore, #tpu.memory_space<semaphore_mem>>)
      %c5 = arith.constant 5 : index
      %82 = memref.load %arg1[%c5] : memref<8xi32, #tpu.memory_space<smem>>
      %c5_i32 = arith.constant 5 : i32
      %c0_i32_50 = arith.constant 0 : i32
      %83 = tpu.memref_slice %arg2[%82, %c0_i32_50] : memref<64x128xf32, #tpu.memory_space<any>> -> memref<1x128xf32, #tpu.memory_space<any>>
      %c5_i32_51 = arith.constant 5 : i32
      %c0_i32_52 = arith.constant 0 : i32
      %84 = tpu.memref_slice %arg12[%c5_i32_51, %c0_i32_52] : memref<8x128xf32, #tpu.memory_space<vmem>> -> memref<1x128xf32, #tpu.memory_space<vmem>>
      %85 = tpu.memref_slice %arg13[%c5_i32] : memref<8x!tpu.dma_semaphore, #tpu.memory_space<semaphore_mem>> -> memref<1x!tpu.dma_semaphore, #tpu.memory_space<semaphore_mem>>
      %86 = tpu.memref_squeeze %85 : memref<1x!tpu.dma_semaphore, #tpu.memory_space<semaphore_mem>> -> memref<!tpu.dma_semaphore, #tpu.memory_space<semaphore_mem>>
      tpu.enqueue_dma source(%83 : memref<1x128xf32, #tpu.memory_space<any>>) target(%84 : memref<1x128xf32, #tpu.memory_space<vmem>>) target_semaphore(%86 : memref<!tpu.dma_semaphore, #tpu.memory_space<semaphore_mem>>)
      %c6 = arith.constant 6 : index
      %87 = memref.load %arg1[%c6] : memref<8xi32, #tpu.memory_space<smem>>
      %c6_i32 = arith.constant 6 : i32
      %c0_i32_53 = arith.constant 0 : i32
      %88 = tpu.memref_slice %arg2[%87, %c0_i32_53] : memref<64x128xf32, #tpu.memory_space<any>> -> memref<1x128xf32, #tpu.memory_space<any>>
      %c6_i32_54 = arith.constant 6 : i32
      %c0_i32_55 = arith.constant 0 : i32
      %89 = tpu.memref_slice %arg12[%c6_i32_54, %c0_i32_55] : memref<8x128xf32, #tpu.memory_space<vmem>> -> memref<1x128xf32, #tpu.memory_space<vmem>>
      %90 = tpu.memref_slice %arg13[%c6_i32] : memref<8x!tpu.dma_semaphore, #tpu.memory_space<semaphore_mem>> -> memref<1x!tpu.dma_semaphore, #tpu.memory_space<semaphore_mem>>
      %91 = tpu.memref_squeeze %90 : memref<1x!tpu.dma_semaphore, #tpu.memory_space<semaphore_mem>> -> memref<!tpu.dma_semaphore, #tpu.memory_space<semaphore_mem>>
      tpu.enqueue_dma source(%88 : memref<1x128xf32, #tpu.memory_space<any>>) target(%89 : memref<1x128xf32, #tpu.memory_space<vmem>>) target_semaphore(%91 : memref<!tpu.dma_semaphore, #tpu.memory_space<semaphore_mem>>)
      %c7 = arith.constant 7 : index
      %92 = memref.load %arg1[%c7] : memref<8xi32, #tpu.memory_space<smem>>
      %c7_i32 = arith.constant 7 : i32
      %c0_i32_56 = arith.constant 0 : i32
      %93 = tpu.memref_slice %arg2[%92, %c0_i32_56] : memref<64x128xf32, #tpu.memory_space<any>> -> memref<1x128xf32, #tpu.memory_space<any>>
      %c7_i32_57 = arith.constant 7 : i32
      %c0_i32_58 = arith.constant 0 : i32
      %94 = tpu.memref_slice %arg12[%c7_i32_57, %c0_i32_58] : memref<8x128xf32, #tpu.memory_space<vmem>> -> memref<1x128xf32, #tpu.memory_space<vmem>>
      %95 = tpu.memref_slice %arg13[%c7_i32] : memref<8x!tpu.dma_semaphore, #tpu.memory_space<semaphore_mem>> -> memref<1x!tpu.dma_semaphore, #tpu.memory_space<semaphore_mem>>
      %96 = tpu.memref_squeeze %95 : memref<1x!tpu.dma_semaphore, #tpu.memory_space<semaphore_mem>> -> memref<!tpu.dma_semaphore, #tpu.memory_space<semaphore_mem>>
      tpu.enqueue_dma source(%93 : memref<1x128xf32, #tpu.memory_space<any>>) target(%94 : memref<1x128xf32, #tpu.memory_space<vmem>>) target_semaphore(%96 : memref<!tpu.dma_semaphore, #tpu.memory_space<semaphore_mem>>)
      %c0_i32_59 = arith.constant 0 : i32
      %c0_i32_60 = arith.constant 0 : i32
      %97 = tpu.memref_slice %arg2[%57, %c0_i32_60] : memref<64x128xf32, #tpu.memory_space<any>> -> memref<1x128xf32, #tpu.memory_space<any>>
      %c0_i32_61 = arith.constant 0 : i32
      %c0_i32_62 = arith.constant 0 : i32
      %98 = tpu.memref_slice %arg12[%c0_i32_61, %c0_i32_62] : memref<8x128xf32, #tpu.memory_space<vmem>> -> memref<1x128xf32, #tpu.memory_space<vmem>>
      %99 = tpu.memref_slice %arg13[%c0_i32_59] : memref<8x!tpu.dma_semaphore, #tpu.memory_space<semaphore_mem>> -> memref<1x!tpu.dma_semaphore, #tpu.memory_space<semaphore_mem>>
      %100 = tpu.memref_squeeze %99 : memref<1x!tpu.dma_semaphore, #tpu.memory_space<semaphore_mem>> -> memref<!tpu.dma_semaphore, #tpu.memory_space<semaphore_mem>>
      tpu.wait_dma2 semaphore(%100 : memref<!tpu.dma_semaphore, #tpu.memory_space<semaphore_mem>>) src(%97 : memref<1x128xf32, #tpu.memory_space<any>>) dst(%98 : memref<1x128xf32, #tpu.memory_space<vmem>>)
      %c1_i32_63 = arith.constant 1 : i32
      %c0_i32_64 = arith.constant 0 : i32
      %101 = tpu.memref_slice %arg2[%62, %c0_i32_64] : memref<64x128xf32, #tpu.memory_space<any>> -> memref<1x128xf32, #tpu.memory_space<any>>
      %c1_i32_65 = arith.constant 1 : i32
      %c0_i32_66 = arith.constant 0 : i32
      %102 = tpu.memref_slice %arg12[%c1_i32_65, %c0_i32_66] : memref<8x128xf32, #tpu.memory_space<vmem>> -> memref<1x128xf32, #tpu.memory_space<vmem>>
      %103 = tpu.memref_slice %arg13[%c1_i32_63] : memref<8x!tpu.dma_semaphore, #tpu.memory_space<semaphore_mem>> -> memref<1x!tpu.dma_semaphore, #tpu.memory_space<semaphore_mem>>
      %104 = tpu.memref_squeeze %103 : memref<1x!tpu.dma_semaphore, #tpu.memory_space<semaphore_mem>> -> memref<!tpu.dma_semaphore, #tpu.memory_space<semaphore_mem>>
      tpu.wait_dma2 semaphore(%104 : memref<!tpu.dma_semaphore, #tpu.memory_space<semaphore_mem>>) src(%101 : memref<1x128xf32, #tpu.memory_space<any>>) dst(%102 : memref<1x128xf32, #tpu.memory_space<vmem>>)
      %c2_i32_67 = arith.constant 2 : i32
      %c0_i32_68 = arith.constant 0 : i32
      %105 = tpu.memref_slice %arg2[%67, %c0_i32_68] : memref<64x128xf32, #tpu.memory_space<any>> -> memref<1x128xf32, #tpu.memory_space<any>>
      %c2_i32_69 = arith.constant 2 : i32
      %c0_i32_70 = arith.constant 0 : i32
      %106 = tpu.memref_slice %arg12[%c2_i32_69, %c0_i32_70] : memref<8x128xf32, #tpu.memory_space<vmem>> -> memref<1x128xf32, #tpu.memory_space<vmem>>
      %107 = tpu.memref_slice %arg13[%c2_i32_67] : memref<8x!tpu.dma_semaphore, #tpu.memory_space<semaphore_mem>> -> memref<1x!tpu.dma_semaphore, #tpu.memory_space<semaphore_mem>>
      %108 = tpu.memref_squeeze %107 : memref<1x!tpu.dma_semaphore, #tpu.memory_space<semaphore_mem>> -> memref<!tpu.dma_semaphore, #tpu.memory_space<semaphore_mem>>
      tpu.wait_dma2 semaphore(%108 : memref<!tpu.dma_semaphore, #tpu.memory_space<semaphore_mem>>) src(%105 : memref<1x128xf32, #tpu.memory_space<any>>) dst(%106 : memref<1x128xf32, #tpu.memory_space<vmem>>)
      %c3_i32_71 = arith.constant 3 : i32
      %c0_i32_72 = arith.constant 0 : i32
      %109 = tpu.memref_slice %arg2[%72, %c0_i32_72] : memref<64x128xf32, #tpu.memory_space<any>> -> memref<1x128xf32, #tpu.memory_space<any>>
      %c3_i32_73 = arith.constant 3 : i32
      %c0_i32_74 = arith.constant 0 : i32
      %110 = tpu.memref_slice %arg12[%c3_i32_73, %c0_i32_74] : memref<8x128xf32, #tpu.memory_space<vmem>> -> memref<1x128xf32, #tpu.memory_space<vmem>>
      %111 = tpu.memref_slice %arg13[%c3_i32_71] : memref<8x!tpu.dma_semaphore, #tpu.memory_space<semaphore_mem>> -> memref<1x!tpu.dma_semaphore, #tpu.memory_space<semaphore_mem>>
      %112 = tpu.memref_squeeze %111 : memref<1x!tpu.dma_semaphore, #tpu.memory_space<semaphore_mem>> -> memref<!tpu.dma_semaphore, #tpu.memory_space<semaphore_mem>>
      tpu.wait_dma2 semaphore(%112 : memref<!tpu.dma_semaphore, #tpu.memory_space<semaphore_mem>>) src(%109 : memref<1x128xf32, #tpu.memory_space<any>>) dst(%110 : memref<1x128xf32, #tpu.memory_space<vmem>>)
      %c4_i32_75 = arith.constant 4 : i32
      %c0_i32_76 = arith.constant 0 : i32
      %113 = tpu.memref_slice %arg2[%77, %c0_i32_76] : memref<64x128xf32, #tpu.memory_space<any>> -> memref<1x128xf32, #tpu.memory_space<any>>
      %c4_i32_77 = arith.constant 4 : i32
      %c0_i32_78 = arith.constant 0 : i32
      %114 = tpu.memref_slice %arg12[%c4_i32_77, %c0_i32_78] : memref<8x128xf32, #tpu.memory_space<vmem>> -> memref<1x128xf32, #tpu.memory_space<vmem>>
      %115 = tpu.memref_slice %arg13[%c4_i32_75] : memref<8x!tpu.dma_semaphore, #tpu.memory_space<semaphore_mem>> -> memref<1x!tpu.dma_semaphore, #tpu.memory_space<semaphore_mem>>
      %116 = tpu.memref_squeeze %115 : memref<1x!tpu.dma_semaphore, #tpu.memory_space<semaphore_mem>> -> memref<!tpu.dma_semaphore, #tpu.memory_space<semaphore_mem>>
      tpu.wait_dma2 semaphore(%116 : memref<!tpu.dma_semaphore, #tpu.memory_space<semaphore_mem>>) src(%113 : memref<1x128xf32, #tpu.memory_space<any>>) dst(%114 : memref<1x128xf32, #tpu.memory_space<vmem>>)
      %c5_i32_79 = arith.constant 5 : i32
      %c0_i32_80 = arith.constant 0 : i32
      %117 = tpu.memref_slice %arg2[%82, %c0_i32_80] : memref<64x128xf32, #tpu.memory_space<any>> -> memref<1x128xf32, #tpu.memory_space<any>>
      %c5_i32_81 = arith.constant 5 : i32
      %c0_i32_82 = arith.constant 0 : i32
      %118 = tpu.memref_slice %arg12[%c5_i32_81, %c0_i32_82] : memref<8x128xf32, #tpu.memory_space<vmem>> -> memref<1x128xf32, #tpu.memory_space<vmem>>
      %119 = tpu.memref_slice %arg13[%c5_i32_79] : memref<8x!tpu.dma_semaphore, #tpu.memory_space<semaphore_mem>> -> memref<1x!tpu.dma_semaphore, #tpu.memory_space<semaphore_mem>>
      %120 = tpu.memref_squeeze %119 : memref<1x!tpu.dma_semaphore, #tpu.memory_space<semaphore_mem>> -> memref<!tpu.dma_semaphore, #tpu.memory_space<semaphore_mem>>
      tpu.wait_dma2 semaphore(%120 : memref<!tpu.dma_semaphore, #tpu.memory_space<semaphore_mem>>) src(%117 : memref<1x128xf32, #tpu.memory_space<any>>) dst(%118 : memref<1x128xf32, #tpu.memory_space<vmem>>)
      %c6_i32_83 = arith.constant 6 : i32
      %c0_i32_84 = arith.constant 0 : i32
      %121 = tpu.memref_slice %arg2[%87, %c0_i32_84] : memref<64x128xf32, #tpu.memory_space<any>> -> memref<1x128xf32, #tpu.memory_space<any>>
      %c6_i32_85 = arith.constant 6 : i32
      %c0_i32_86 = arith.constant 0 : i32
      %122 = tpu.memref_slice %arg12[%c6_i32_85, %c0_i32_86] : memref<8x128xf32, #tpu.memory_space<vmem>> -> memref<1x128xf32, #tpu.memory_space<vmem>>
      %123 = tpu.memref_slice %arg13[%c6_i32_83] : memref<8x!tpu.dma_semaphore, #tpu.memory_space<semaphore_mem>> -> memref<1x!tpu.dma_semaphore, #tpu.memory_space<semaphore_mem>>
      %124 = tpu.memref_squeeze %123 : memref<1x!tpu.dma_semaphore, #tpu.memory_space<semaphore_mem>> -> memref<!tpu.dma_semaphore, #tpu.memory_space<semaphore_mem>>
      tpu.wait_dma2 semaphore(%124 : memref<!tpu.dma_semaphore, #tpu.memory_space<semaphore_mem>>) src(%121 : memref<1x128xf32, #tpu.memory_space<any>>) dst(%122 : memref<1x128xf32, #tpu.memory_space<vmem>>)
      %c7_i32_87 = arith.constant 7 : i32
      %c0_i32_88 = arith.constant 0 : i32
      %125 = tpu.memref_slice %arg2[%92, %c0_i32_88] : memref<64x128xf32, #tpu.memory_space<any>> -> memref<1x128xf32, #tpu.memory_space<any>>
      %c7_i32_89 = arith.constant 7 : i32
      %c0_i32_90 = arith.constant 0 : i32
      %126 = tpu.memref_slice %arg12[%c7_i32_89, %c0_i32_90] : memref<8x128xf32, #tpu.memory_space<vmem>> -> memref<1x128xf32, #tpu.memory_space<vmem>>
      %127 = tpu.memref_slice %arg13[%c7_i32_87] : memref<8x!tpu.dma_semaphore, #tpu.memory_space<semaphore_mem>> -> memref<1x!tpu.dma_semaphore, #tpu.memory_space<semaphore_mem>>
      %128 = tpu.memref_squeeze %127 : memref<1x!tpu.dma_semaphore, #tpu.memory_space<semaphore_mem>> -> memref<!tpu.dma_semaphore, #tpu.memory_space<semaphore_mem>>
      tpu.wait_dma2 semaphore(%128 : memref<!tpu.dma_semaphore, #tpu.memory_space<semaphore_mem>>) src(%125 : memref<1x128xf32, #tpu.memory_space<any>>) dst(%126 : memref<1x128xf32, #tpu.memory_space<vmem>>)
      %c0_91 = arith.constant 0 : index
      %c0_92 = arith.constant 0 : index
      %129 = vector.load %arg12[%c0_91, %c0_92] : memref<8x128xf32, #tpu.memory_space<vmem>>, vector<8x128xf32>
      %cst_93 = arith.constant 0.000000e+00 : f32
      %130 = vector.broadcast %cst_93 : f32 to vector<8x128xf32>
      %131 = arith.maximumf %129, %130 : vector<8x128xf32>
      %c0_94 = arith.constant 0 : index
      %c0_95 = arith.constant 0 : index
      %132 = vector.load %arg12[%c0_94, %c0_95] : memref<8x128xf32, #tpu.memory_space<vmem>>, vector<8x128xf32>
      tpu.vector_store %arg12[%c0_94, %c0_95], %131 {strides = array<i32>} : memref<8x128xf32, #tpu.memory_space<vmem>>, vector<8x128xf32>,
    } else {
    }
    %c0 = arith.constant 0 : index
    %c0_1 = arith.constant 0 : index
    %3 = vector.load %arg12[%c0, %c0_1] : memref<8x128xf32, #tpu.memory_space<vmem>>, vector<8x128xf32>
    %c0_2 = arith.constant 0 : index
    %c0_3 = arith.constant 0 : index
    %c0_4 = arith.constant 0 : index
    %4 = vector.load %arg3[%c0_2, %c0_3, %c0_4] : memref<1x8x128xf32, #tpu.memory_space<vmem>>, vector<1x8x128xf32>
    %5 = vector.shape_cast %4 : vector<1x8x128xf32> to vector<8x128xf32>
    %c0_5 = arith.constant 0 : index
    %c0_6 = arith.constant 0 : index
    %c0_7 = arith.constant 0 : index
    %6 = vector.load %arg4[%c0_5, %c0_6, %c0_7] : memref<1x8x128xf32, #tpu.memory_space<vmem>>, vector<1x8x128xf32>
    %7 = vector.shape_cast %6 : vector<1x8x128xf32> to vector<8x128xf32>
    %8 = tpu.concatenate %3, %5 in 1 : vector<8x128xf32>, vector<8x128xf32> -> vector<8x256xf32>
    %c0_8 = arith.constant 0 : index
    %c0_9 = arith.constant 0 : index
    %c0_10 = arith.constant 0 : index
    %9 = vector.load %arg5[%c0_8, %c0_9, %c0_10] : memref<1x256x512xf32, #tpu.memory_space<vmem>>, vector<1x256x512xf32>
    %10 = vector.shape_cast %9 : vector<1x256x512xf32> to vector<256x512xf32>
    %cst = arith.constant dense<0.000000e+00> : vector<8x512xf32>
    %11 = tpu.matmul %8, %10, %cst {dimension_numbers = #tpu.dot_dimension_numbers<[1], [0], [0], [1], [0, 0, 1, 1], [], []>} : vector<8x256xf32>, vector<256x512xf32>, vector<8x512xf32> -> vector<8x512xf32>
    %c0_11 = arith.constant 0 : index
    %c0_12 = arith.constant 0 : index
    %c0_13 = arith.constant 0 : index
    %12 = vector.load %arg6[%c0_11, %c0_12, %c0_13] : memref<1x1x512xf32, #tpu.memory_space<vmem>>, vector<1x1x512xf32>
    %13 = vector.shape_cast %12 : vector<1x1x512xf32> to vector<1x512xf32>
    %14 = vector.broadcast %13 : vector<1x512xf32> to vector<8x512xf32>
    %15 = arith.addf %11, %14 : vector<8x512xf32>
    %16 = vector.extract_strided_slice %15 {offsets = [0, 0], sizes = [8, 128], strides = [1, 1]} : vector<8x512xf32> to vector<8x128xf32>
    %cst_14 = arith.constant 5.000000e-01 : f32
    %17 = vector.broadcast %cst_14 : f32 to vector<8x128xf32>
    %18 = arith.mulf %17, %16 : vector<8x128xf32>
    %19 = math.tanh %18 : vector<8x128xf32>
    %cst_15 = arith.constant 1.000000e+00 : f32
    %20 = vector.broadcast %cst_15 : f32 to vector<8x128xf32>
    %21 = arith.addf %19, %20 : vector<8x128xf32>
    %cst_16 = arith.constant 5.000000e-01 : f32
    %22 = vector.broadcast %cst_16 : f32 to vector<8x128xf32>
    %23 = arith.mulf %22, %21 : vector<8x128xf32>
    %24 = vector.extract_strided_slice %15 {offsets = [0, 128], sizes = [8, 128], strides = [1, 1]} : vector<8x512xf32> to vector<8x128xf32>
    %cst_17 = arith.constant 5.000000e-01 : f32
    %25 = vector.broadcast %cst_17 : f32 to vector<8x128xf32>
    %26 = arith.mulf %25, %24 : vector<8x128xf32>
    %27 = math.tanh %26 : vector<8x128xf32>
    %cst_18 = arith.constant 1.000000e+00 : f32
    %28 = vector.broadcast %cst_18 : f32 to vector<8x128xf32>
    %29 = arith.addf %27, %28 : vector<8x128xf32>
    %cst_19 = arith.constant 5.000000e-01 : f32
    %30 = vector.broadcast %cst_19 : f32 to vector<8x128xf32>
    %31 = arith.mulf %30, %29 : vector<8x128xf32>
    %32 = vector.extract_strided_slice %15 {offsets = [0, 256], sizes = [8, 128], strides = [1, 1]} : vector<8x512xf32> to vector<8x128xf32>
    %33 = math.tanh %32 : vector<8x128xf32>
    %34 = vector.extract_strided_slice %15 {offsets = [0, 384], sizes = [8, 128], strides = [1, 1]} : vector<8x512xf32> to vector<8x128xf32>
    %cst_20 = arith.constant 5.000000e-01 : f32
    %35 = vector.broadcast %cst_20 : f32 to vector<8x128xf32>
    %36 = arith.mulf %35, %34 : vector<8x128xf32>
    %37 = math.tanh %36 : vector<8x128xf32>
    %cst_21 = arith.constant 1.000000e+00 : f32
    %38 = vector.broadcast %cst_21 : f32 to vector<8x128xf32>
    %39 = arith.addf %37, %38 : vector<8x128xf32>
    %cst_22 = arith.constant 5.000000e-01 : f32
    %40 = vector.broadcast %cst_22 : f32 to vector<8x128xf32>
    %41 = arith.mulf %40, %39 : vector<8x128xf32>
    %42 = arith.mulf %31, %7 : vector<8x128xf32>
    %43 = arith.mulf %23, %33 : vector<8x128xf32>
    %44 = arith.addf %42, %43 : vector<8x128xf32>
    %45 = math.tanh %44 : vector<8x128xf32>
    %46 = arith.mulf %41, %45 : vector<8x128xf32>
    %c0_23 = arith.constant 0 : index
    %c0_24 = arith.constant 0 : index
    %c0_25 = arith.constant 0 : index
    %47 = vector.load %arg10[%c0_23, %c0_24, %c0_25] : memref<1x8x128xf32, #tpu.memory_space<vmem>>, vector<1x8x128xf32>
    %48 = vector.shape_cast %47 : vector<1x8x128xf32> to vector<8x128xf32>
    %49 = vector.shape_cast %46 : vector<8x128xf32> to vector<1x8x128xf32>
    tpu.vector_store %arg10[%c0_23, %c0_24, %c0_25], %49 {strides = array<i32>} : memref<1x8x128xf32, #tpu.memory_space<vmem>>, vector<1x8x128xf32>,
    %c0_26 = arith.constant 0 : index
    %c0_27 = arith.constant 0 : index
    %c0_28 = arith.constant 0 : index
    %50 = vector.load %arg11[%c0_26, %c0_27, %c0_28] : memref<1x8x128xf32, #tpu.memory_space<vmem>>, vector<1x8x128xf32>
    %51 = vector.shape_cast %50 : vector<1x8x128xf32> to vector<8x128xf32>
    %52 = vector.shape_cast %44 : vector<8x128xf32> to vector<1x8x128xf32>
    tpu.vector_store %arg11[%c0_26, %c0_27, %c0_28], %52 {strides = array<i32>} : memref<1x8x128xf32, #tpu.memory_space<vmem>>, vector<1x8x128xf32>,
    %c0_29 = arith.constant 0 : index
    %c0_30 = arith.constant 0 : index
    %53 = vector.load %arg12[%c0_29, %c0_30] : memref<8x128xf32, #tpu.memory_space<vmem>>, vector<8x128xf32>
    tpu.vector_store %arg12[%c0_29, %c0_30], %46 {strides = array<i32>} : memref<8x128xf32, #tpu.memory_space<vmem>>, vector<8x128xf32>,
    %c1_i32 = arith.constant 1 : i32
    %54 = arith.cmpi eq, %arg0, %c1_i32 : i32
    %55 = arith.extui %54 : i1 to i32
    %c0_i32_31 = arith.constant 0 : i32
    %56 = arith.cmpi ne, %55, %c0_i32_31 : i32
    scf.if %56 {
      %c0_32 = arith.constant 0 : index
      %c0_33 = arith.constant 0 : index
      %57 = vector.load %arg7[%c0_32, %c0_33] : memref<128x128xf32, #tpu.memory_space<vmem>>, vector<128x128xf32>
      %cst_34 = arith.constant dense<0.000000e+00> : vector<8x128xf32>
      %58 = tpu.matmul %46, %57, %cst_34 {dimension_numbers = #tpu.dot_dimension_numbers<[1], [0], [0], [1], [0, 0, 1, 1], [], []>} : vector<8x128xf32>, vector<128x128xf32>, vector<8x128xf32> -> vector<8x128xf32>
      %c0_35 = arith.constant 0 : index
      %c0_36 = arith.constant 0 : index
      %59 = vector.load %arg8[%c0_35, %c0_36] : memref<1x128xf32, #tpu.memory_space<vmem>>, vector<1x128xf32>
      %60 = vector.broadcast %59 : vector<1x128xf32> to vector<8x128xf32>
      %61 = arith.addf %58, %60 : vector<8x128xf32>
      %cst_37 = arith.constant dense<0xFF800000> : vector<8xf32>
      %62 = vector.multi_reduction <maximumf>, %61, %cst_37 [1] : vector<8x128xf32> to vector<8xf32>
      %63 = vector.shape_cast %62 : vector<8xf32> to vector<8x1xf32>
      %64 = vector.broadcast %63 : vector<8x1xf32> to vector<8x128xf32>
      %65 = arith.subf %61, %64 : vector<8x128xf32>
      %66 = math.exp %65 : vector<8x128xf32>
      %cst_38 = arith.constant dense<0.000000e+00> : vector<8xf32>
      %67 = vector.multi_reduction <add>, %66, %cst_38 [1] : vector<8x128xf32> to vector<8xf32>
      %68 = vector.shape_cast %67 : vector<8xf32> to vector<8x1xf32>
      %69 = math.log %68 : vector<8x1xf32>
      %70 = arith.addf %63, %69 : vector<8x1xf32>
      %71 = vector.broadcast %70 : vector<8x1xf32> to vector<8x128xf32>
      %72 = arith.subf %61, %71 : vector<8x128xf32>
      %c0_39 = arith.constant 0 : index
      %c0_40 = arith.constant 0 : index
      %73 = vector.load %arg9[%c0_39, %c0_40] : memref<8x128xf32, #tpu.memory_space<vmem>>, vector<8x128xf32>
      tpu.vector_store %arg9[%c0_39, %c0_40], %72 {strides = array<i32>} : memref<8x128xf32, #tpu.memory_space<vmem>>, vector<8x128xf32>,
    } else {
    }
    return
  }
  func.func @transform_1(%arg0: i32, %arg1: memref<8xi32, #tpu.memory_space<smem>>) -> (i32, i32, i32) {
    %c0_i32 = arith.constant 0 : i32
    %c0_i32_0 = arith.constant 0 : i32
    %c0_i32_1 = arith.constant 0 : i32
    return %arg0, %c0_i32, %c0_i32_0 : i32, i32, i32
  }
  func.func @transform_2(%arg0: i32, %arg1: memref<8xi32, #tpu.memory_space<smem>>) -> (i32, i32, i32) {
    %c0_i32 = arith.constant 0 : i32
    %c0_i32_0 = arith.constant 0 : i32
    %c0_i32_1 = arith.constant 0 : i32
    return %arg0, %c0_i32, %c0_i32_0 : i32, i32, i32
  }
  func.func @transform_3(%arg0: i32, %arg1: memref<8xi32, #tpu.memory_space<smem>>) -> (i32, i32, i32) {
    %c0_i32 = arith.constant 0 : i32
    %c0_i32_0 = arith.constant 0 : i32
    %c0_i32_1 = arith.constant 0 : i32
    return %arg0, %c0_i32, %c0_i32_0 : i32, i32, i32
  }
  func.func @transform_4(%arg0: i32, %arg1: memref<8xi32, #tpu.memory_space<smem>>) -> (i32, i32, i32) {
    %c0_i32 = arith.constant 0 : i32
    %c0_i32_0 = arith.constant 0 : i32
    %c0_i32_1 = arith.constant 0 : i32
    return %arg0, %c0_i32, %c0_i32_0 : i32, i32, i32
  }
  func.func @transform_5(%arg0: i32, %arg1: memref<8xi32, #tpu.memory_space<smem>>) -> (i32, i32) {
    %c0_i32 = arith.constant 0 : i32
    %c0_i32_0 = arith.constant 0 : i32
    %c0_i32_1 = arith.constant 0 : i32
    return %c0_i32, %c0_i32_0 : i32, i32
  }
  func.func @transform_6(%arg0: i32, %arg1: memref<8xi32, #tpu.memory_space<smem>>) -> (i32, i32) {
    %c0_i32 = arith.constant 0 : i32
    %c0_i32_0 = arith.constant 0 : i32
    %c0_i32_1 = arith.constant 0 : i32
    return %c0_i32, %c0_i32_0 : i32, i32
  }
  func.func @transform_7(%arg0: i32, %arg1: memref<8xi32, #tpu.memory_space<smem>>) -> (i32, i32) {
    %c0_i32 = arith.constant 0 : i32
    %c0_i32_0 = arith.constant 0 : i32
    %c0_i32_1 = arith.constant 0 : i32
    return %c0_i32, %c0_i32_0 : i32, i32
  }
  func.func @transform_8(%arg0: i32, %arg1: memref<8xi32, #tpu.memory_space<smem>>) -> (i32, i32, i32) {
    %c0_i32 = arith.constant 0 : i32
    %c0_i32_0 = arith.constant 0 : i32
    %c0_i32_1 = arith.constant 0 : i32
    return %arg0, %c0_i32, %c0_i32_0 : i32, i32, i32
  }
  func.func @transform_9(%arg0: i32, %arg1: memref<8xi32, #tpu.memory_space<smem>>) -> (i32, i32, i32) {
    %c0_i32 = arith.constant 0 : i32
    %c0_i32_0 = arith.constant 0 : i32
    %c0_i32_1 = arith.constant 0 : i32
    return %arg0, %c0_i32, %c0_i32_0 : i32, i32, i32
  }
}

</mosaic_0001>

<llo_original>
// kernel: _decoder_step.1
$region0: #{_decoder_step.1}
  #allocation0 [shape = 'u32[]', space=smem, size = 0x4, offset = 0x4, fixed_abs, tag = 'smem constant byte address 0x4 - core index']
  #allocation1 [shape = 'u32[144,128]{1,0:T(1,128)}', space=vmem, size = 0x12000, scoped, tag = 'internal scratch']
  #allocation2 [shape = 'f32[8,128]{1,0:T(8,128)}', space=vmem, size = 0x1000, scoped, tag = 'scratch operand']
  #allocation3 [shape = 's32[8]{0}', space=sflag, size = 0x20, scoped, tag = 'scratch operand']
  #allocation4 [shape = 's32[1]{0}', space=sflag, size = 0x4, scoped, tag = 'scoped memory for _decoder_step.1']
  #allocation5 [shape = 'u8[512]{0}', space=smem, size = 0x200, scoped, tag = 'prefetched SMEM operand 0']
  #allocation14 [shape = 's32[]', space=sflag, size = 0x4, offset = 0, fixed_abs, tag = 'sflag constant byte address 0x0 - dummy sync flag']
  #allocation15 [shape = 's32[]', space=sflag, size = 0x4, offset = 0, fixed_abs, tag = 'sflag constant byte address 0x0 - dummy sync flag']
  #allocation16 [shape = 's32[]', space=sflag, size = 0x4, offset = 0, fixed_abs, tag = 'sflag constant byte address 0x0 - dummy sync flag']
  #allocation17 [shape = 's32[]', space=sflag, size = 0x4, offset = 0, fixed_abs, tag = 'sflag constant byte address 0x0 - dummy sync flag']
  #allocation18 [shape = 's32[]', space=sflag, size = 0x4, offset = 0, fixed_abs, tag = 'sflag constant byte address 0x0 - dummy sync flag']
  #allocation19 [shape = 's32[]', space=sflag, size = 0x4, offset = 0, fixed_abs, tag = 'sflag constant byte address 0x0 - dummy sync flag']
  #allocation20 [shape = 's32[]', space=sflag, size = 0x4, offset = 0, fixed_abs, tag = 'sflag constant byte address 0x0 - dummy sync flag']
  #allocation21 [shape = 's32[]', space=sflag, size = 0x4, offset = 0, fixed_abs, tag = 'sflag constant byte address 0x0 - dummy sync flag']
  %s0 = inlined_call_operand.vmem [shape: s32[8], index: 0, kind: input, shape index: {}]
  %s1 = inlined_call_operand.vmem [shape: f32[64,128], index: 1, kind: input, shape index: {}]
  %s2 = inlined_call_operand.vmem [shape: f32[2,8,128], index: 2, kind: input, shape index: {}]
  %s3 = inlined_call_operand.vmem [shape: f32[2,8,128], index: 3, kind: input, shape index: {}]
  %s4 = inlined_call_operand.hbm [shape: f32[2,256,512], index: 4, kind: input, shape index: {}]
  %s5 = inlined_call_operand.vmem [shape: f32[2,1,512], index: 5, kind: input, shape index: {}]
  %s6 = inlined_call_operand.hbm [shape: f32[128,128], index: 6, kind: input, shape index: {}]
  %s7 = inlined_call_operand.vmem [shape: f32[1,128], index: 7, kind: input, shape index: {}]
  %s8 = inlined_call_operand.vmem [shape: f32[8,128], index: 8, kind: output, shape index: {0}]
  %s9 = inlined_call_operand.hbm [shape: f32[2,8,128], index: 9, kind: output, shape index: {1}]
  %s10 = inlined_call_operand.hbm [shape: f32[2,8,128], index: 10, kind: output, shape index: {2}]
  %11 = xla_tuple %s8, %s9, %s10
  %s12 = sld [smem:[#allocation0]]
  $region329: #{_decoder_step.1} parent=0
    _
  %s14 = ssub.s32 1, %s12
  %s15 = scalar_select 0, %s14, %s12
  %s16 = sshll.u32 %s0, 4
  %s17 = int_to_ptr.vmem [resolvable:$true] %s16
  %19 = dma.vmem_to_smem %s17, 16, [#allocation5], [#allocation4]
  %20 = dma.done [#allocation4], 16
  %21 = sfence
  $region1: #{_decoder_step.1} parent=0
    #allocation6 [shape = 'u8[1048576]{0}', space=vmem, size = 0x100000, scoped, tag = 'input window, operand 4']
    #allocation7 [shape = 's32[2]{0}', space=sflag, size = 0x8, scoped, tag = 'scoped memory for _decoder_step.1']
    #allocation8 [shape = 's32[2]{0}', space=sflag, size = 0x8, scoped, tag = 'scoped memory for _decoder_step.1']
    #allocation9 [shape = 'u8[65536]{0}', space=vmem, size = 0x10000, scoped, tag = 'input window, operand 6, single buffered']
    #allocation10 [shape = 's32[1]{0}', space=sflag, size = 0x4, scoped, tag = 'scoped memory for _decoder_step.1']
    #allocation11 [shape = 'u8[8192]{0}', space=vmem, size = 0x2000, scoped, tag = 'output window, operand 1']
    #allocation12 [shape = 'u8[8192]{0}', space=vmem, size = 0x2000, scoped, tag = 'output window, operand 2']
    #allocation13 [shape = 's32[2]{0}', space=sflag, size = 0x8, scoped, tag = 'scoped memory for _decoder_step.1']
    %22 = vsyncpa [#allocation7], 0
    %s23 = scalar_lea.sflag [#allocation7], 1
    %24 = vsyncpa %s23, 0
    %25 = vsyncpa [#allocation10], 0
    %26 = vsyncpa [#allocation8], 0
    %s27 = scalar_lea.sflag [#allocation8], 1
    %28 = vsyncpa %s27, 0
    %29 = vsyncpa [#allocation13], 0
    %s30 = scalar_lea.sflag [#allocation13], 1
    %31 = vsyncpa %s30, 0
    loop: start=0, step=1, limit=4
    $region2: #{_decoder_step.1} parent=1 // loop_pre_header
      _
    $region3: #{_decoder_step.1} parent=1 // loop_header
      %s33 = sphi 0, %s37
      %p34 = scmp.ge.s32.totalorder %s33, 4
      %s43 = sphi 0, %s45
      %s46 = sphi 0, %s43
      %s47 = sphi 0, %s46
      %s63 = sphi 0, %s47
      %s69 = sphi 0, %s71
      %s72 = sphi 0, %s69
      %s73 = sphi 0, %s72
      %s89 = sphi 0, %s73
      %s95 = sphi 0, %s97
      %s98 = sphi 0, %s95
      %s99 = sphi 0, %s98
      %s115 = sphi 0, %s99
      %s121 = sphi 0, %s123
      %s124 = sphi 0, %s121
      %s125 = sphi 0, %s124
      %s141 = sphi 0, %s125
      %s145 = sphi 0, %s145
      %s147 = sphi 0, %s145
      %s148 = sphi 0, %s147
      %s162 = sphi 0, %s148
      %s166 = sphi 0, %s166
      %s168 = sphi 0, %s166
      %s169 = sphi 0, %s168
      %s183 = sphi 0, %s169
      %s187 = sphi 0, %s187
      %s189 = sphi 0, %s187
      %s190 = sphi 0, %s189
      %s204 = sphi 0, %s190
      %s210 = sphi 0, %s212
      %s213 = sphi 0, %s210
      %s214 = sphi 0, %s213
      %s230 = sphi 0, %s214
      %s236 = sphi 0, %s238
      %s239 = sphi 0, %s236
      %s240 = sphi 0, %s239
      %s256 = sphi 0, %s240
    $region4: #{_decoder_step.1} parent=1 // loop_header_branch
      %36 = sbr.rel (%p34) target = $region8
    $region5: #{_decoder_step.1} parent=1 // loop_body
      %s38 = ssub.s32 %s33, 1
      %s39 = ssub.s32 %s33, 2
      %s40 = sadd.s32 %s33, 1
      %s41 = ssub.s32 %s33, %s40
      %p42 = scmp.eq.s32.totalorder %s41, 0
      %s44 = sadd.s32 %s43, 1
      %s45 = scalar_select %p42, %s43, %s44
      %p48 = pneg %p42
      %p49 = scmp.eq.s32.totalorder %s33, 1
      %p50 = por %p48, %p49
      %p51 = scmp.ne.s32.totalorder %s43, %s46
      %p52 = scmp.eq.s32.totalorder %s33, 0
      %p53 = por %p51, %p52
      %p54 = scmp.ne.s32.totalorder %s43, %s46
      %p55 = scmp.eq.s32.totalorder %s38, 1
      %p56 = por %p54, %p55
      %p57 = scmp.ne.s32.totalorder %s46, %s47
      %p58 = scmp.eq.s32.totalorder %s38, 0
      %p59 = por %p57, %p58
      %p60 = scmp.ne.s32.totalorder %s46, %s47
      %p61 = scmp.eq.s32.totalorder %s39, 1
      %p62 = por %p60, %p61
      %p64 = scmp.ne.s32.totalorder %s47, %s63
      %p65 = scmp.eq.s32.totalorder %s39, 0
      %p66 = por %p64, %p65
      %s67 = ssub.s32 %s33, %s40
      %p68 = scmp.eq.s32.totalorder %s67, 0
      %s70 = sadd.s32 %s69, 1
      %s71 = scalar_select %p68, %s69, %s70
      %p74 = pneg %p68
      %p75 = scmp.eq.s32.totalorder %s33, 1
      %p76 = por %p74, %p75
      %p77 = scmp.ne.s32.totalorder %s69, %s72
      %p78 = scmp.eq.s32.totalorder %s33, 0
      %p79 = por %p77, %p78
      %p80 = scmp.ne.s32.totalorder %s69, %s72
      %p81 = scmp.eq.s32.totalorder %s38, 1
      %p82 = por %p80, %p81
      %p83 = scmp.ne.s32.totalorder %s72, %s73
      %p84 = scmp.eq.s32.totalorder %s38, 0
      %p85 = por %p83, %p84
      %p86 = scmp.ne.s32.totalorder %s72, %s73
      %p87 = scmp.eq.s32.totalorder %s39, 1
      %p88 = por %p86, %p87
      %p90 = scmp.ne.s32.totalorder %s73, %s89
      %p91 = scmp.eq.s32.totalorder %s39, 0
      %p92 = por %p90, %p91
      %s93 = ssub.s32 %s33, %s40
      %p94 = scmp.eq.s32.totalorder %s93, 0
      %s96 = sadd.s32 %s95, 1
      %s97 = scalar_select %p94, %s95, %s96
      %p100 = pneg %p94
      %p101 = scmp.eq.s32.totalorder %s33, 1
      %p102 = por %p100, %p101
      %p103 = scmp.ne.s32.totalorder %s95, %s98
      %p104 = scmp.eq.s32.totalorder %s33, 0
      %p105 = por %p103, %p104
      %p106 = scmp.ne.s32.totalorder %s95, %s98
      %p107 = scmp.eq.s32.totalorder %s38, 1
      %p108 = por %p106, %p107
      %p109 = scmp.ne.s32.totalorder %s98, %s99
      %p110 = scmp.eq.s32.totalorder %s38, 0
      %p111 = por %p109, %p110
      %p112 = scmp.ne.s32.totalorder %s98, %s99
      %p113 = scmp.eq.s32.totalorder %s39, 1
      %p114 = por %p112, %p113
      %p116 = scmp.ne.s32.totalorder %s99, %s115
      %p117 = scmp.eq.s32.totalorder %s39, 0
      %p118 = por %p116, %p117
      %s119 = ssub.s32 %s33, %s40
      %p120 = scmp.eq.s32.totalorder %s119, 0
      %s122 = sadd.s32 %s121, 1
      %s123 = scalar_select %p120, %s121, %s122
      %p126 = pneg %p120
      %p127 = scmp.eq.s32.totalorder %s33, 1
      %p128 = por %p126, %p127
      %p129 = scmp.ne.s32.totalorder %s121, %s124
      %p130 = scmp.eq.s32.totalorder %s33, 0
      %p131 = por %p129, %p130
      %p132 = scmp.ne.s32.totalorder %s121, %s124
      %p133 = scmp.eq.s32.totalorder %s38, 1
      %p134 = por %p132, %p133
      %p135 = scmp.ne.s32.totalorder %s124, %s125
      %p136 = scmp.eq.s32.totalorder %s38, 0
      %p137 = por %p135, %p136
      %p138 = scmp.ne.s32.totalorder %s124, %s125
      %p139 = scmp.eq.s32.totalorder %s39, 1
      %p140 = por %p138, %p139
      %p142 = scmp.ne.s32.totalorder %s125, %s141
      %p143 = scmp.eq.s32.totalorder %s39, 0
      %p144 = por %p142, %p143
      %s146 = sadd.s32 %s145, 1
      %p149 = scmp.eq.s32.totalorder %s33, 1
      %p150 = scmp.ne.s32.totalorder %s145, %s147
      %p151 = scmp.eq.s32.totalorder %s33, 0
      %p152 = por %p150, %p151
      %p153 = scmp.ne.s32.totalorder %s145, %s147
      %p154 = scmp.eq.s32.totalorder %s38, 1
      %p155 = por %p153, %p154
      %p156 = scmp.ne.s32.totalorder %s147, %s148
      %p157 = scmp.eq.s32.totalorder %s38, 0
      %p158 = por %p156, %p157
      %p159 = scmp.ne.s32.totalorder %s147, %s148
      %p160 = scmp.eq.s32.totalorder %s39, 1
      %p161 = por %p159, %p160
      %p163 = scmp.ne.s32.totalorder %s148, %s162
      %p164 = scmp.eq.s32.totalorder %s39, 0
      %p165 = por %p163, %p164
      %s167 = sadd.s32 %s166, 1
      %p170 = scmp.eq.s32.totalorder %s33, 1
      %p171 = scmp.ne.s32.totalorder %s166, %s168
      %p172 = scmp.eq.s32.totalorder %s33, 0
      %p173 = por %p171, %p172
      %p174 = scmp.ne.s32.totalorder %s166, %s168
      %p175 = scmp.eq.s32.totalorder %s38, 1
      %p176 = por %p174, %p175
      %p177 = scmp.ne.s32.totalorder %s168, %s169
      %p178 = scmp.eq.s32.totalorder %s38, 0
      %p179 = por %p177, %p178
      %p180 = scmp.ne.s32.totalorder %s168, %s169
      %p181 = scmp.eq.s32.totalorder %s39, 1
      %p182 = por %p180, %p181
      %p184 = scmp.ne.s32.totalorder %s169, %s183
      %p185 = scmp.eq.s32.totalorder %s39, 0
      %p186 = por %p184, %p185
      %s188 = sadd.s32 %s187, 1
      %p191 = scmp.eq.s32.totalorder %s33, 1
      %p192 = scmp.ne.s32.totalorder %s187, %s189
      %p193 = scmp.eq.s32.totalorder %s33, 0
      %p194 = por %p192, %p193
      %p195 = scmp.ne.s32.totalorder %s187, %s189
      %p196 = scmp.eq.s32.totalorder %s38, 1
      %p197 = por %p195, %p196
      %p198 = scmp.ne.s32.totalorder %s189, %s190
      %p199 = scmp.eq.s32.totalorder %s38, 0
      %p200 = por %p198, %p199
      %p201 = scmp.ne.s32.totalorder %s189, %s190
      %p202 = scmp.eq.s32.totalorder %s39, 1
      %p203 = por %p201, %p202
      %p205 = scmp.ne.s32.totalorder %s190, %s204
      %p206 = scmp.eq.s32.totalorder %s39, 0
      %p207 = por %p205, %p206
      %s208 = ssub.s32 %s33, %s40
      %p209 = scmp.eq.s32.totalorder %s208, 0
      %s211 = sadd.s32 %s210, 1
      %s212 = scalar_select %p209, %s210, %s211
      %p215 = pneg %p209
      %p216 = scmp.eq.s32.totalorder %s33, 1
      %p217 = por %p215, %p216
      %p218 = scmp.ne.s32.totalorder %s210, %s213
      %p219 = scmp.eq.s32.totalorder %s33, 0
      %p220 = por %p218, %p219
      %p221 = scmp.ne.s32.totalorder %s210, %s213
      %p222 = scmp.eq.s32.totalorder %s38, 1
      %p223 = por %p221, %p222
      %p224 = scmp.ne.s32.totalorder %s213, %s214
      %p225 = scmp.eq.s32.totalorder %s38, 0
      %p226 = por %p224, %p225
      %p227 = scmp.ne.s32.totalorder %s213, %s214
      %p228 = scmp.eq.s32.totalorder %s39, 1
      %p229 = por %p227, %p228
      %p231 = scmp.ne.s32.totalorder %s214, %s230
      %p232 = scmp.eq.s32.totalorder %s39, 0
      %p233 = por %p231, %p232
      %s234 = ssub.s32 %s33, %s40
      %p235 = scmp.eq.s32.totalorder %s234, 0
      %s237 = sadd.s32 %s236, 1
      %s238 = scalar_select %p235, %s236, %s237
      %p241 = pneg %p235
      %p242 = scmp.eq.s32.totalorder %s33, 1
      %p243 = por %p241, %p242
      %p244 = scmp.ne.s32.totalorder %s236, %s239
      %p245 = scmp.eq.s32.totalorder %s33, 0
      %p246 = por %p244, %p245
      %p247 = scmp.ne.s32.totalorder %s236, %s239
      %p248 = scmp.eq.s32.totalorder %s38, 1
      %p249 = por %p247, %p248
      %p250 = scmp.ne.s32.totalorder %s239, %s240
      %p251 = scmp.eq.s32.totalorder %s38, 0
      %p252 = por %p250, %p251
      %p253 = scmp.ne.s32.totalorder %s239, %s240
      %p254 = scmp.eq.s32.totalorder %s39, 1
      %p255 = por %p253, %p254
      %p257 = scmp.ne.s32.totalorder %s240, %s256
      %p258 = scmp.eq.s32.totalorder %s39, 0
      %p259 = por %p257, %p258
      %p260 = scmp.le.s32.totalorder 1, %s33
      %p261 = scmp.lt.s32.totalorder %s33, 3
      %p262 = pnand %p260, %p261
      %p263 = pneg %p262
      // Predicated region
      $region9: #{_decoder_step.1} parent=5 // pred_check
        _
      $region10: #{_decoder_step.1} parent=5 // pred_check_branch
        %265 = sbr.rel (%p262) target = $region12
      $region11: #{_decoder_step.1} parent=5 // pred_region
        %s266 = ssub.s32 %s33, 1
        // Predicated region
        $region13: #{_decoder_step.1} parent=11 // pred_check
          %p267 = pneg %p158
        $region14: #{_decoder_step.1} parent=11 // pred_check_branch
          %269 = sbr.rel (%p267) target = $region16
        $region15: #{_decoder_step.1} parent=11 // pred_region
          %s271 = ssub.s32 2048, 2048
          %272 = vsyncadd [#allocation10], %s271
          %s273 = sshll.u32 [#allocation9], 4
          %s274 = int_to_ptr.vmem [resolvable:$true] %s273
          %279 = dma.hbm_to_vmem [thread:$0]  %s6, 2048, %s274, [#allocation10], 128, 128, 8
        $region16: #{_decoder_step.1} parent=11 // pred_fallthru
          _
        // Predicated region
        $region17: #{_decoder_step.1} parent=11 // pred_check
          %p280 = pneg %p179
        $region18: #{_decoder_step.1} parent=11 // pred_check_branch
          %282 = sbr.rel (%p280) target = $region20
        $region19: #{_decoder_step.1} parent=11 // pred_region
          _
        $region20: #{_decoder_step.1} parent=11 // pred_fallthru
          _
      $region12: #{_decoder_step.1} parent=5 // pred_fallthru
        _
      %p283 = scmp.lt.s32.totalorder %s33, 2
      // Predicated region
      $region21: #{_decoder_step.1} parent=5 // pred_check
        %p284 = pneg %p283
      $region22: #{_decoder_step.1} parent=5 // pred_check_branch
        %286 = sbr.rel (%p284) target = $region24
      $region23: #{_decoder_step.1} parent=5 // pred_region
        // Predicated region
        $region25: #{_decoder_step.1} parent=23 // pred_check
          %p287 = pneg %p53
        $region26: #{_decoder_step.1} parent=23 // pred_check_branch
          %289 = sbr.rel (%p287) target = $region28
        $region27: #{_decoder_step.1} parent=23 // pred_region
          %p290 = scmp.lt.s32.totalorder %s33, 1
          %s291 = scalar_select %p290, %s33, 1
          %s292 = smul.addr %s291, 8
          %s293 = scalar_lea.vmem %s2, %s292
        $region28: #{_decoder_step.1} parent=23 // pred_fallthru
          _
        // Predicated region
        $region29: #{_decoder_step.1} parent=23 // pred_check
          %p294 = pneg %p79
        $region30: #{_decoder_step.1} parent=23 // pred_check_branch
          %296 = sbr.rel (%p294) target = $region32
        $region31: #{_decoder_step.1} parent=23 // pred_region
          %p297 = scmp.lt.s32.totalorder %s33, 1
          %s298 = scalar_select %p297, %s33, 1
          %s299 = smul.addr %s298, 8
          %s300 = scalar_lea.vmem %s3, %s299
        $region32: #{_decoder_step.1} parent=23 // pred_fallthru
          _
        // Predicated region
        $region33: #{_decoder_step.1} parent=23 // pred_check
          %p301 = pneg %p105
        $region34: #{_decoder_step.1} parent=23 // pred_check_branch
          %303 = sbr.rel (%p301) target = $region36
        $region35: #{_decoder_step.1} parent=23 // pred_region
          %s304 = sand.u32 %s95, 1
          %s305 = scalar_lea.sflag [#allocation7], %s304
          %s306 = sand.u32 %s95, 1
          %s307 = smul.addr %s306, 1024
          %s308 = scalar_lea.vmem [#allocation6], %s307
          %s310 = ssub.s32 16384, 16384
          %311 = vsyncadd %s305, %s310
          %s312 = smul.addr %s33, 128
          %s313 = smul.addr %s312, 128
          %s314 = scalar_lea.hbm %s4, %s313
          %s315 = sshll.u32 %s308, 4
          %s316 = int_to_ptr.vmem [resolvable:$true] %s315
          %321 = dma.hbm_to_vmem [thread:$0]  %s314, 16384, %s316, %s305, 512, 512, 32
        $region36: #{_decoder_step.1} parent=23 // pred_fallthru
          _
        // Predicated region
        $region37: #{_decoder_step.1} parent=23 // pred_check
          %p322 = pneg %p131
        $region38: #{_decoder_step.1} parent=23 // pred_check_branch
          %324 = sbr.rel (%p322) target = $region40
        $region39: #{_decoder_step.1} parent=23 // pred_region
          %p325 = scmp.lt.s32.totalorder %s33, 1
          %s326 = scalar_select %p325, %s33, 1
          %s327 = smul.addr %s326, 4
          %s328 = scalar_lea.vmem %s5, %s327
        $region40: #{_decoder_step.1} parent=23 // pred_fallthru
          _
      $region24: #{_decoder_step.1} parent=5 // pred_fallthru
        _
      %p329 = scmp.le.s32.totalorder 1, %s33
      %p330 = scmp.lt.s32.totalorder %s33, 3
      %p331 = pnand %p329, %p330
      %p332 = pneg %p331
      // Predicated region
      $region41: #{_decoder_step.1} parent=5 // pred_check
        _
      $region42: #{_decoder_step.1} parent=5 // pred_check_branch
        %334 = sbr.rel (%p331) target = $region44
      $region43: #{_decoder_step.1} parent=5 // pred_region
        %s335 = ssub.s32 %s33, 1
        %s336 = sand.u32 %s98, 1
        %s337 = scalar_lea.sflag [#allocation7], %s336
        %s338 = sand.u32 %s98, 1
        %s339 = smul.addr %s338, 1024
        %s340 = scalar_lea.vmem [#allocation6], %s339
        // Predicated region
        $region45: #{_decoder_step.1} parent=43 // pred_check
          %p341 = pneg %p111
        $region46: #{_decoder_step.1} parent=43 // pred_check_branch
          %343 = sbr.rel (%p341) target = $region48
        $region47: #{_decoder_step.1} parent=43 // pred_region
          %344 = dma.done %s337, 16384
        $region48: #{_decoder_step.1} parent=43 // pred_fallthru
          _
        // Predicated region
        $region49: #{_decoder_step.1} parent=43 // pred_check
          %p345 = pneg %p158
        $region50: #{_decoder_step.1} parent=43 // pred_check_branch
          %347 = sbr.rel (%p345) target = $region52
        $region51: #{_decoder_step.1} parent=43 // pred_region
          %348 = dma.done [#allocation10], 2048
        $region52: #{_decoder_step.1} parent=43 // pred_fallthru
          _
        %p349 = scmp.lt.s32.totalorder %s38, 1
        %s350 = scalar_select %p349, %s38, 1
        %s351 = smul.addr %s350, 8
        %s352 = scalar_lea.vmem %s2, %s351
        %p353 = pneg %p59
        %p354 = pneg %p56
        %p355 = scmp.lt.s32.totalorder %s38, 1
        %s356 = scalar_select %p355, %s38, 1
        %s357 = smul.addr %s356, 8
        %s358 = scalar_lea.vmem %s3, %s357
        %p359 = pneg %p85
        %p360 = pneg %p82
        %s361 = sand.u32 %s98, 1
        %s362 = scalar_lea.sflag [#allocation7], %s361
        %s363 = sand.u32 %s98, 1
        %s364 = smul.addr %s363, 1024
        %s365 = scalar_lea.vmem [#allocation6], %s364
        %p366 = pneg %p111
        %p367 = pneg %p108
        %p368 = scmp.lt.s32.totalorder %s38, 1
        %s369 = scalar_select %p368, %s38, 1
        %s370 = smul.addr %s369, 4
        %s371 = scalar_lea.vmem %s5, %s370
        %p372 = pneg %p137
        %p373 = pneg %p134
        %p374 = pneg %p158
        %p375 = pneg %p155
        %p376 = pneg %p179
        %p377 = pneg %p176
        %p378 = pneg %p200
        %p379 = pneg %p197
        %p380 = pneg %p226
        %p381 = pneg %p223
        %s382 = sand.u32 %s213, 1
        %s383 = scalar_lea.sflag [#allocation8], %s382
        %s384 = sand.u32 %s213, 1
        %s385 = smul.addr %s384, 8
        %s386 = scalar_lea.vmem [#allocation11], %s385
        %p387 = pneg %p252
        %p388 = pneg %p249
        %s389 = sand.u32 %s239, 1
        %s390 = scalar_lea.sflag [#allocation13], %s389
        %s391 = sand.u32 %s239, 1
        %s392 = smul.addr %s391, 8
        %s393 = scalar_lea.vmem [#allocation12], %s392
        %p394 = scmp.lt.s32.totalorder %s38, 1
        %s395 = scalar_select %p394, %s38, 1
        %s396 = smul.addr %s395, 8
        %s397 = scalar_lea.vmem %s2, %s396
        %p398 = scmp.lt.s32.totalorder %s38, 1
        %s399 = scalar_select %p398, %s38, 1
        %s400 = smul.addr %s399, 8
        %s401 = scalar_lea.vmem %s3, %s400
        %p402 = scmp.lt.s32.totalorder %s38, 1
        %s403 = scalar_select %p402, %s38, 1
        %s404 = smul.addr %s403, 4
        %s405 = scalar_lea.vmem %s5, %s404
        %p406 = scmp.eq.s32.totalorder %s38, 0
        // Predicated region
        $region53: #{_decoder_step.1} parent=43 // pred_check
          %p407 = pneg %p406
        $region54: #{_decoder_step.1} parent=43 // pred_check_branch
          %409 = sbr.rel (%p407) target = $region56
        $region55: #{_decoder_step.1} parent=43 // pred_region
          %s410 = sld [smem:[#allocation5]]
          %s411 = scalar_lea.vmem %s1, %s410
          %p413 = scmp.lt.u32.totalorder 1, 8
          %p414 = pneg %p413
          // Predicated region
          $region57: #{_decoder_step.1} parent=55 // pred_check
            _
          $region58: #{_decoder_step.1} parent=55 // pred_check_branch
            %416 = sbr.rel (%p413) target = $region60
          $region59: #{_decoder_step.1} parent=55 // pred_region
            %s432 = sand.u32 1, 7
            %p433 = scmp.eq.s32.totalorder %s432, 0
            %p434 = pneg %p433
            // Predicated region
            $region72: #{_decoder_step.1} parent=59 // pred_check
              _
            $region73: #{_decoder_step.1} parent=59 // pred_check_branch
              %436 = sbr.rel (%p433) target = $region75
            $region74: #{_decoder_step.1} parent=59 // pred_region
              %s437 = sand.u32 1, 7
              %s438 = ssub.s32 1, %s437
              %s439 = scalar_lea.vmem %s411, %s438
              %s440 = ssub.s32 1, %s437
              %s441 = scalar_lea.vmem [#allocation2], %s440
              %s442 = sshll.u32 1, %s437
              %s443 = ssub.s32 %s442, 1
              loop: start=0, step=1, limit=1
              $region76: #{_decoder_step.1} parent=74 // loop_pre_header
                _
              $region77: #{_decoder_step.1} parent=74 // loop_header
                %s445 = sphi 0, %s449
                %p446 = scmp.ge.s32.totalorder %s445, 1
                %s450 = sphi %s439, %s439
                %s451 = sphi %s441, %s441
              $region78: #{_decoder_step.1} parent=74 // loop_header_branch
                %448 = sbr.rel (%p446) target = $region82
              $region79: #{_decoder_step.1} parent=74 // loop_body
                %v452 = vld [vmem:[%s450] sm:%s443]
                %453 = vst [vmem:[%s451] sm:%s443] %v452
              $region80: #{_decoder_step.1} parent=74 // loop_footer
                %s449 = sadd.s32 1, %s445
              $region81: #{_decoder_step.1} parent=74 // loop_footer_branch
                %444 = sbr.rel target = $region77
              $region82: #{_decoder_step.1} parent=74 // loop_exit
                _
            $region75: #{_decoder_step.1} parent=59 // pred_fallthru
              _
          $region60: #{_decoder_step.1} parent=55 // pred_fallthru
            _
          // Predicated region
          $region61: #{_decoder_step.1} parent=55 // pred_check
            %p417 = pneg %p413
          $region62: #{_decoder_step.1} parent=55 // pred_check_branch
            %419 = sbr.rel (%p417) target = $region64
          $region63: #{_decoder_step.1} parent=55 // pred_region
            %s420 = sshll.u32 1, 1
            %s421 = ssub.s32 %s420, 1
            loop: start=0, step=1, limit=1
            $region65: #{_decoder_step.1} parent=63 // loop_pre_header
              _
            $region66: #{_decoder_step.1} parent=63 // loop_header
              %s423 = sphi 0, %s427
              %p424 = scmp.ge.s32.totalorder %s423, 1
              %s428 = sphi %s411, %s411
              %s429 = sphi [#allocation2], [#allocation2]
            $region67: #{_decoder_step.1} parent=63 // loop_header_branch
              %426 = sbr.rel (%p424) target = $region71
            $region68: #{_decoder_step.1} parent=63 // loop_body
              %v430 = vld [vmem:[%s428] sm:%s421]
              %431 = vst [vmem:[%s429] sm:%s421] %v430
            $region69: #{_decoder_step.1} parent=63 // loop_footer
              %s427 = sadd.s32 1, %s423
            $region70: #{_decoder_step.1} parent=63 // loop_footer_branch
              %422 = sbr.rel target = $region66
            $region71: #{_decoder_step.1} parent=63 // loop_exit
              _
          $region64: #{_decoder_step.1} parent=55 // pred_fallthru
            _
          // Predicated region
          $region83: #{_decoder_step.1} parent=55 // pred_check
            _
          $region84: #{_decoder_step.1} parent=55 // pred_check_branch
            %456 = sbr.rel (0) target = $region86
          $region85: #{_decoder_step.1} parent=55 // pred_region
            %457 = vsyncadd [#allocation3], 16
          $region86: #{_decoder_step.1} parent=55 // pred_fallthru
            _
          %s458 = sld [smem:[#allocation5 + $0x1]]
          %s459 = scalar_lea.vmem %s1, %s458
          %s460 = scalar_lea.vmem [#allocation2], 1
          %s461 = scalar_lea.sflag [#allocation3], 1
          %p463 = scmp.lt.u32.totalorder 1, 8
          %p464 = pneg %p463
          // Predicated region
          $region87: #{_decoder_step.1} parent=55 // pred_check
            _
          $region88: #{_decoder_step.1} parent=55 // pred_check_branch
            %466 = sbr.rel (%p463) target = $region90
          $region89: #{_decoder_step.1} parent=55 // pred_region
            %s482 = sand.u32 1, 7
            %p483 = scmp.eq.s32.totalorder %s482, 0
            %p484 = pneg %p483
            // Predicated region
            $region102: #{_decoder_step.1} parent=89 // pred_check
              _
            $region103: #{_decoder_step.1} parent=89 // pred_check_branch
              %486 = sbr.rel (%p483) target = $region105
            $region104: #{_decoder_step.1} parent=89 // pred_region
              %s487 = sand.u32 1, 7
              %s488 = ssub.s32 1, %s487
              %s489 = scalar_lea.vmem %s459, %s488
              %s490 = ssub.s32 1, %s487
              %s491 = scalar_lea.vmem %s460, %s490 [#allocation2]
              %s492 = sshll.u32 1, %s487
              %s493 = ssub.s32 %s492, 1
              loop: start=0, step=1, limit=1
              $region106: #{_decoder_step.1} parent=104 // loop_pre_header
                _
              $region107: #{_decoder_step.1} parent=104 // loop_header
                %s495 = sphi 0, %s499
                %p496 = scmp.ge.s32.totalorder %s495, 1
                %s500 = sphi %s489, %s489
                %s501 = sphi %s491, %s491
              $region108: #{_decoder_step.1} parent=104 // loop_header_branch
                %498 = sbr.rel (%p496) target = $region112
              $region109: #{_decoder_step.1} parent=104 // loop_body
                %v502 = vld [vmem:[%s500] sm:%s493]
                %503 = vst [vmem:[%s501] sm:%s493] %v502
              $region110: #{_decoder_step.1} parent=104 // loop_footer
                %s499 = sadd.s32 1, %s495
              $region111: #{_decoder_step.1} parent=104 // loop_footer_branch
                %494 = sbr.rel target = $region107
              $region112: #{_decoder_step.1} parent=104 // loop_exit
                _
            $region105: #{_decoder_step.1} parent=89 // pred_fallthru
              _
          $region90: #{_decoder_step.1} parent=55 // pred_fallthru
            _
          // Predicated region
          $region91: #{_decoder_step.1} parent=55 // pred_check
            %p467 = pneg %p463
          $region92: #{_decoder_step.1} parent=55 // pred_check_branch
            %469 = sbr.rel (%p467) target = $region94
          $region93: #{_decoder_step.1} parent=55 // pred_region
            %s470 = sshll.u32 1, 1
            %s471 = ssub.s32 %s470, 1
            loop: start=0, step=1, limit=1
            $region95: #{_decoder_step.1} parent=93 // loop_pre_header
              _
            $region96: #{_decoder_step.1} parent=93 // loop_header
              %s473 = sphi 0, %s477
              %p474 = scmp.ge.s32.totalorder %s473, 1
              %s478 = sphi %s459, %s459
              %s479 = sphi %s460, %s460
            $region97: #{_decoder_step.1} parent=93 // loop_header_branch
              %476 = sbr.rel (%p474) target = $region101
            $region98: #{_decoder_step.1} parent=93 // loop_body
              %v480 = vld [vmem:[%s478] sm:%s471]
              %481 = vst [vmem:[%s479] sm:%s471] %v480
            $region99: #{_decoder_step.1} parent=93 // loop_footer
              %s477 = sadd.s32 1, %s473
            $region100: #{_decoder_step.1} parent=93 // loop_footer_branch
              %472 = sbr.rel target = $region96
            $region101: #{_decoder_step.1} parent=93 // loop_exit
              _
          $region94: #{_decoder_step.1} parent=55 // pred_fallthru
            _
          // Predicated region
          $region113: #{_decoder_step.1} parent=55 // pred_check
            _
          $region114: #{_decoder_step.1} parent=55 // pred_check_branch
            %506 = sbr.rel (0) target = $region116
          $region115: #{_decoder_step.1} parent=55 // pred_region
            %507 = vsyncadd %s461, 16
          $region116: #{_decoder_step.1} parent=55 // pred_fallthru
            _
          %s508 = sld [smem:[#allocation5 + $0x2]]
          %s509 = scalar_lea.vmem %s1, %s508
          %s510 = scalar_lea.vmem [#allocation2], 2
          %s511 = scalar_lea.sflag [#allocation3], 2
          %p513 = scmp.lt.u32.totalorder 1, 8
          %p514 = pneg %p513
          // Predicated region
          $region117: #{_decoder_step.1} parent=55 // pred_check
            _
          $region118: #{_decoder_step.1} parent=55 // pred_check_branch
            %516 = sbr.rel (%p513) target = $region120
          $region119: #{_decoder_step.1} parent=55 // pred_region
            %s532 = sand.u32 1, 7
            %p533 = scmp.eq.s32.totalorder %s532, 0
            %p534 = pneg %p533
            // Predicated region
            $region132: #{_decoder_step.1} parent=119 // pred_check
              _
            $region133: #{_decoder_step.1} parent=119 // pred_check_branch
              %536 = sbr.rel (%p533) target = $region135
            $region134: #{_decoder_step.1} parent=119 // pred_region
              %s537 = sand.u32 1, 7
              %s538 = ssub.s32 1, %s537
              %s539 = scalar_lea.vmem %s509, %s538
              %s540 = ssub.s32 1, %s537
              %s541 = scalar_lea.vmem %s510, %s540 [#allocation2]
              %s542 = sshll.u32 1, %s537
              %s543 = ssub.s32 %s542, 1
              loop: start=0, step=1, limit=1
              $region136: #{_decoder_step.1} parent=134 // loop_pre_header
                _
              $region137: #{_decoder_step.1} parent=134 // loop_header
                %s545 = sphi 0, %s549
                %p546 = scmp.ge.s32.totalorder %s545, 1
                %s550 = sphi %s539, %s539
                %s551 = sphi %s541, %s541
              $region138: #{_decoder_step.1} parent=134 // loop_header_branch
                %548 = sbr.rel (%p546) target = $region142
              $region139: #{_decoder_step.1} parent=134 // loop_body
                %v552 = vld [vmem:[%s550] sm:%s543]
                %553 = vst [vmem:[%s551] sm:%s543] %v552
              $region140: #{_decoder_step.1} parent=134 // loop_footer
                %s549 = sadd.s32 1, %s545
              $region141: #{_decoder_step.1} parent=134 // loop_footer_branch
                %544 = sbr.rel target = $region137
              $region142: #{_decoder_step.1} parent=134 // loop_exit
                _
            $region135: #{_decoder_step.1} parent=119 // pred_fallthru
              _
          $region120: #{_decoder_step.1} parent=55 // pred_fallthru
            _
          // Predicated region
          $region121: #{_decoder_step.1} parent=55 // pred_check
            %p517 = pneg %p513
          $region122: #{_decoder_step.1} parent=55 // pred_check_branch
            %519 = sbr.rel (%p517) target = $region124
          $region123: #{_decoder_step.1} parent=55 // pred_region
            %s520 = sshll.u32 1, 1
            %s521 = ssub.s32 %s520, 1
            loop: start=0, step=1, limit=1
            $region125: #{_decoder_step.1} parent=123 // loop_pre_header
              _
            $region126: #{_decoder_step.1} parent=123 // loop_header
              %s523 = sphi 0, %s527
              %p524 = scmp.ge.s32.totalorder %s523, 1
              %s528 = sphi %s509, %s509
              %s529 = sphi %s510, %s510
            $region127: #{_decoder_step.1} parent=123 // loop_header_branch
              %526 = sbr.rel (%p524) target = $region131
            $region128: #{_decoder_step.1} parent=123 // loop_body
              %v530 = vld [vmem:[%s528] sm:%s521]
              %531 = vst [vmem:[%s529] sm:%s521] %v530
            $region129: #{_decoder_step.1} parent=123 // loop_footer
              %s527 = sadd.s32 1, %s523
            $region130: #{_decoder_step.1} parent=123 // loop_footer_branch
              %522 = sbr.rel target = $region126
            $region131: #{_decoder_step.1} parent=123 // loop_exit
              _
          $region124: #{_decoder_step.1} parent=55 // pred_fallthru
            _
          // Predicated region
          $region143: #{_decoder_step.1} parent=55 // pred_check
            _
          $region144: #{_decoder_step.1} parent=55 // pred_check_branch
            %556 = sbr.rel (0) target = $region146
          $region145: #{_decoder_step.1} parent=55 // pred_region
            %557 = vsyncadd %s511, 16
          $region146: #{_decoder_step.1} parent=55 // pred_fallthru
            _
          %s558 = sld [smem:[#allocation5 + $0x3]]
          %s559 = scalar_lea.vmem %s1, %s558
          %s560 = scalar_lea.vmem [#allocation2], 3
          %s561 = scalar_lea.sflag [#allocation3], 3
          %p563 = scmp.lt.u32.totalorder 1, 8
          %p564 = pneg %p563
          // Predicated region
          $region147: #{_decoder_step.1} parent=55 // pred_check
            _
          $region148: #{_decoder_step.1} parent=55 // pred_check_branch
            %566 = sbr.rel (%p563) target = $region150
          $region149: #{_decoder_step.1} parent=55 // pred_region
            %s582 = sand.u32 1, 7
            %p583 = scmp.eq.s32.totalorder %s582, 0
            %p584 = pneg %p583
            // Predicated region
            $region162: #{_decoder_step.1} parent=149 // pred_check
              _
            $region163: #{_decoder_step.1} parent=149 // pred_check_branch
              %586 = sbr.rel (%p583) target = $region165
            $region164: #{_decoder_step.1} parent=149 // pred_region
              %s587 = sand.u32 1, 7
              %s588 = ssub.s32 1, %s587
              %s589 = scalar_lea.vmem %s559, %s588
              %s590 = ssub.s32 1, %s587
              %s591 = scalar_lea.vmem %s560, %s590 [#allocation2]
              %s592 = sshll.u32 1, %s587
              %s593 = ssub.s32 %s592, 1
              loop: start=0, step=1, limit=1
              $region166: #{_decoder_step.1} parent=164 // loop_pre_header
                _
              $region167: #{_decoder_step.1} parent=164 // loop_header
                %s595 = sphi 0, %s599
                %p596 = scmp.ge.s32.totalorder %s595, 1
                %s600 = sphi %s589, %s589
                %s601 = sphi %s591, %s591
              $region168: #{_decoder_step.1} parent=164 // loop_header_branch
                %598 = sbr.rel (%p596) target = $region172
              $region169: #{_decoder_step.1} parent=164 // loop_body
                %v602 = vld [vmem:[%s600] sm:%s593]
                %603 = vst [vmem:[%s601] sm:%s593] %v602
              $region170: #{_decoder_step.1} parent=164 // loop_footer
                %s599 = sadd.s32 1, %s595
              $region171: #{_decoder_step.1} parent=164 // loop_footer_branch
                %594 = sbr.rel target = $region167
              $region172: #{_decoder_step.1} parent=164 // loop_exit
                _
            $region165: #{_decoder_step.1} parent=149 // pred_fallthru
              _
          $region150: #{_decoder_step.1} parent=55 // pred_fallthru
            _
          // Predicated region
          $region151: #{_decoder_step.1} parent=55 // pred_check
            %p567 = pneg %p563
          $region152: #{_decoder_step.1} parent=55 // pred_check_branch
            %569 = sbr.rel (%p567) target = $region154
          $region153: #{_decoder_step.1} parent=55 // pred_region
            %s570 = sshll.u32 1, 1
            %s571 = ssub.s32 %s570, 1
            loop: start=0, step=1, limit=1
            $region155: #{_decoder_step.1} parent=153 // loop_pre_header
              _
            $region156: #{_decoder_step.1} parent=153 // loop_header
              %s573 = sphi 0, %s577
              %p574 = scmp.ge.s32.totalorder %s573, 1
              %s578 = sphi %s559, %s559
              %s579 = sphi %s560, %s560
            $region157: #{_decoder_step.1} parent=153 // loop_header_branch
              %576 = sbr.rel (%p574) target = $region161
            $region158: #{_decoder_step.1} parent=153 // loop_body
              %v580 = vld [vmem:[%s578] sm:%s571]
              %581 = vst [vmem:[%s579] sm:%s571] %v580
            $region159: #{_decoder_step.1} parent=153 // loop_footer
              %s577 = sadd.s32 1, %s573
            $region160: #{_decoder_step.1} parent=153 // loop_footer_branch
              %572 = sbr.rel target = $region156
            $region161: #{_decoder_step.1} parent=153 // loop_exit
              _
          $region154: #{_decoder_step.1} parent=55 // pred_fallthru
            _
          // Predicated region
          $region173: #{_decoder_step.1} parent=55 // pred_check
            _
          $region174: #{_decoder_step.1} parent=55 // pred_check_branch
            %606 = sbr.rel (0) target = $region176
          $region175: #{_decoder_step.1} parent=55 // pred_region
            %607 = vsyncadd %s561, 16
          $region176: #{_decoder_step.1} parent=55 // pred_fallthru
            _
          %s608 = sld [smem:[#allocation5 + $0x4]]
          %s609 = scalar_lea.vmem %s1, %s608
          %s610 = scalar_lea.vmem [#allocation2], 4
          %s611 = scalar_lea.sflag [#allocation3], 4
          %p613 = scmp.lt.u32.totalorder 1, 8
          %p614 = pneg %p613
          // Predicated region
          $region177: #{_decoder_step.1} parent=55 // pred_check
            _
          $region178: #{_decoder_step.1} parent=55 // pred_check_branch
            %616 = sbr.rel (%p613) target = $region180
          $region179: #{_decoder_step.1} parent=55 // pred_region
            %s632 = sand.u32 1, 7
            %p633 = scmp.eq.s32.totalorder %s632, 0
            %p634 = pneg %p633
            // Predicated region
            $region192: #{_decoder_step.1} parent=179 // pred_check
              _
            $region193: #{_decoder_step.1} parent=179 // pred_check_branch
              %636 = sbr.rel (%p633) target = $region195
            $region194: #{_decoder_step.1} parent=179 // pred_region
              %s637 = sand.u32 1, 7
              %s638 = ssub.s32 1, %s637
              %s639 = scalar_lea.vmem %s609, %s638
              %s640 = ssub.s32 1, %s637
              %s641 = scalar_lea.vmem %s610, %s640 [#allocation2]
              %s642 = sshll.u32 1, %s637
              %s643 = ssub.s32 %s642, 1
              loop: start=0, step=1, limit=1
              $region196: #{_decoder_step.1} parent=194 // loop_pre_header
                _
              $region197: #{_decoder_step.1} parent=194 // loop_header
                %s645 = sphi 0, %s649
                %p646 = scmp.ge.s32.totalorder %s645, 1
                %s650 = sphi %s639, %s639
                %s651 = sphi %s641, %s641
              $region198: #{_decoder_step.1} parent=194 // loop_header_branch
                %648 = sbr.rel (%p646) target = $region202
              $region199: #{_decoder_step.1} parent=194 // loop_body
                %v652 = vld [vmem:[%s650] sm:%s643]
                %653 = vst [vmem:[%s651] sm:%s643] %v652
              $region200: #{_decoder_step.1} parent=194 // loop_footer
                %s649 = sadd.s32 1, %s645
              $region201: #{_decoder_step.1} parent=194 // loop_footer_branch
                %644 = sbr.rel target = $region197
              $region202: #{_decoder_step.1} parent=194 // loop_exit
                _
            $region195: #{_decoder_step.1} parent=179 // pred_fallthru
              _
          $region180: #{_decoder_step.1} parent=55 // pred_fallthru
            _
          // Predicated region
          $region181: #{_decoder_step.1} parent=55 // pred_check
            %p617 = pneg %p613
          $region182: #{_decoder_step.1} parent=55 // pred_check_branch
            %619 = sbr.rel (%p617) target = $region184
          $region183: #{_decoder_step.1} parent=55 // pred_region
            %s620 = sshll.u32 1, 1
            %s621 = ssub.s32 %s620, 1
            loop: start=0, step=1, limit=1
            $region185: #{_decoder_step.1} parent=183 // loop_pre_header
              _
            $region186: #{_decoder_step.1} parent=183 // loop_header
              %s623 = sphi 0, %s627
              %p624 = scmp.ge.s32.totalorder %s623, 1
              %s628 = sphi %s609, %s609
              %s629 = sphi %s610, %s610
            $region187: #{_decoder_step.1} parent=183 // loop_header_branch
              %626 = sbr.rel (%p624) target = $region191
            $region188: #{_decoder_step.1} parent=183 // loop_body
              %v630 = vld [vmem:[%s628] sm:%s621]
              %631 = vst [vmem:[%s629] sm:%s621] %v630
            $region189: #{_decoder_step.1} parent=183 // loop_footer
              %s627 = sadd.s32 1, %s623
            $region190: #{_decoder_step.1} parent=183 // loop_footer_branch
              %622 = sbr.rel target = $region186
            $region191: #{_decoder_step.1} parent=183 // loop_exit
              _
          $region184: #{_decoder_step.1} parent=55 // pred_fallthru
            _
          // Predicated region
          $region203: #{_decoder_step.1} parent=55 // pred_check
            _
          $region204: #{_decoder_step.1} parent=55 // pred_check_branch
            %656 = sbr.rel (0) target = $region206
          $region205: #{_decoder_step.1} parent=55 // pred_region
            %657 = vsyncadd %s611, 16
          $region206: #{_decoder_step.1} parent=55 // pred_fallthru
            _
          %s658 = sld [smem:[#allocation5 + $0x5]]
          %s659 = scalar_lea.vmem %s1, %s658
          %s660 = scalar_lea.vmem [#allocation2], 5
          %s661 = scalar_lea.sflag [#allocation3], 5
          %p663 = scmp.lt.u32.totalorder 1, 8
          %p664 = pneg %p663
          // Predicated region
          $region207: #{_decoder_step.1} parent=55 // pred_check
            _
          $region208: #{_decoder_step.1} parent=55 // pred_check_branch
            %666 = sbr.rel (%p663) target = $region210
          $region209: #{_decoder_step.1} parent=55 // pred_region
            %s682 = sand.u32 1, 7
            %p683 = scmp.eq.s32.totalorder %s682, 0
            %p684 = pneg %p683
            // Predicated region
            $region222: #{_decoder_step.1} parent=209 // pred_check
              _
            $region223: #{_decoder_step.1} parent=209 // pred_check_branch
              %686 = sbr.rel (%p683) target = $region225
            $region224: #{_decoder_step.1} parent=209 // pred_region
              %s687 = sand.u32 1, 7
              %s688 = ssub.s32 1, %s687
              %s689 = scalar_lea.vmem %s659, %s688
              %s690 = ssub.s32 1, %s687
              %s691 = scalar_lea.vmem %s660, %s690 [#allocation2]
              %s692 = sshll.u32 1, %s687
              %s693 = ssub.s32 %s692, 1
              loop: start=0, step=1, limit=1
              $region226: #{_decoder_step.1} parent=224 // loop_pre_header
                _
              $region227: #{_decoder_step.1} parent=224 // loop_header
                %s695 = sphi 0, %s699
                %p696 = scmp.ge.s32.totalorder %s695, 1
                %s700 = sphi %s689, %s689
                %s701 = sphi %s691, %s691
              $region228: #{_decoder_step.1} parent=224 // loop_header_branch
                %698 = sbr.rel (%p696) target = $region232
              $region229: #{_decoder_step.1} parent=224 // loop_body
                %v702 = vld [vmem:[%s700] sm:%s693]
                %703 = vst [vmem:[%s701] sm:%s693] %v702
              $region230: #{_decoder_step.1} parent=224 // loop_footer
                %s699 = sadd.s32 1, %s695
              $region231: #{_decoder_step.1} parent=224 // loop_footer_branch
                %694 = sbr.rel target = $region227
              $region232: #{_decoder_step.1} parent=224 // loop_exit
                _
            $region225: #{_decoder_step.1} parent=209 // pred_fallthru
              _
          $region210: #{_decoder_step.1} parent=55 // pred_fallthru
            _
          // Predicated region
          $region211: #{_decoder_step.1} parent=55 // pred_check
            %p667 = pneg %p663
          $region212: #{_decoder_step.1} parent=55 // pred_check_branch
            %669 = sbr.rel (%p667) target = $region214
          $region213: #{_decoder_step.1} parent=55 // pred_region
            %s670 = sshll.u32 1, 1
            %s671 = ssub.s32 %s670, 1
            loop: start=0, step=1, limit=1
            $region215: #{_decoder_step.1} parent=213 // loop_pre_header
              _
            $region216: #{_decoder_step.1} parent=213 // loop_header
              %s673 = sphi 0, %s677
              %p674 = scmp.ge.s32.totalorder %s673, 1
              %s678 = sphi %s659, %s659
              %s679 = sphi %s660, %s660
            $region217: #{_decoder_step.1} parent=213 // loop_header_branch
              %676 = sbr.rel (%p674) target = $region221
            $region218: #{_decoder_step.1} parent=213 // loop_body
              %v680 = vld [vmem:[%s678] sm:%s671]
              %681 = vst [vmem:[%s679] sm:%s671] %v680
            $region219: #{_decoder_step.1} parent=213 // loop_footer
              %s677 = sadd.s32 1, %s673
            $region220: #{_decoder_step.1} parent=213 // loop_footer_branch
              %672 = sbr.rel target = $region216
            $region221: #{_decoder_step.1} parent=213 // loop_exit
              _
          $region214: #{_decoder_step.1} parent=55 // pred_fallthru
            _
          // Predicated region
          $region233: #{_decoder_step.1} parent=55 // pred_check
            _
          $region234: #{_decoder_step.1} parent=55 // pred_check_branch
            %706 = sbr.rel (0) target = $region236
          $region235: #{_decoder_step.1} parent=55 // pred_region
            %707 = vsyncadd %s661, 16
          $region236: #{_decoder_step.1} parent=55 // pred_fallthru
            _
          %s708 = sld [smem:[#allocation5 + $0x6]]
          %s709 = scalar_lea.vmem %s1, %s708
          %s710 = scalar_lea.vmem [#allocation2], 6
          %s711 = scalar_lea.sflag [#allocation3], 6
          %p713 = scmp.lt.u32.totalorder 1, 8
          %p714 = pneg %p713
          // Predicated region
          $region237: #{_decoder_step.1} parent=55 // pred_check
            _
          $region238: #{_decoder_step.1} parent=55 // pred_check_branch
            %716 = sbr.rel (%p713) target = $region240
          $region239: #{_decoder_step.1} parent=55 // pred_region
            %s732 = sand.u32 1, 7
            %p733 = scmp.eq.s32.totalorder %s732, 0
            %p734 = pneg %p733
            // Predicated region
            $region252: #{_decoder_step.1} parent=239 // pred_check
              _
            $region253: #{_decoder_step.1} parent=239 // pred_check_branch
              %736 = sbr.rel (%p733) target = $region255
            $region254: #{_decoder_step.1} parent=239 // pred_region
              %s737 = sand.u32 1, 7
              %s738 = ssub.s32 1, %s737
              %s739 = scalar_lea.vmem %s709, %s738
              %s740 = ssub.s32 1, %s737
              %s741 = scalar_lea.vmem %s710, %s740 [#allocation2]
              %s742 = sshll.u32 1, %s737
              %s743 = ssub.s32 %s742, 1
              loop: start=0, step=1, limit=1
              $region256: #{_decoder_step.1} parent=254 // loop_pre_header
                _
              $region257: #{_decoder_step.1} parent=254 // loop_header
                %s745 = sphi 0, %s749
                %p746 = scmp.ge.s32.totalorder %s745, 1
                %s750 = sphi %s739, %s739
                %s751 = sphi %s741, %s741
              $region258: #{_decoder_step.1} parent=254 // loop_header_branch
                %748 = sbr.rel (%p746) target = $region262
              $region259: #{_decoder_step.1} parent=254 // loop_body
                %v752 = vld [vmem:[%s750] sm:%s743]
                %753 = vst [vmem:[%s751] sm:%s743] %v752
              $region260: #{_decoder_step.1} parent=254 // loop_footer
                %s749 = sadd.s32 1, %s745
              $region261: #{_decoder_step.1} parent=254 // loop_footer_branch
                %744 = sbr.rel target = $region257
              $region262: #{_decoder_step.1} parent=254 // loop_exit
                _
            $region255: #{_decoder_step.1} parent=239 // pred_fallthru
              _
          $region240: #{_decoder_step.1} parent=55 // pred_fallthru
            _
          // Predicated region
          $region241: #{_decoder_step.1} parent=55 // pred_check
            %p717 = pneg %p713
          $region242: #{_decoder_step.1} parent=55 // pred_check_branch
            %719 = sbr.rel (%p717) target = $region244
          $region243: #{_decoder_step.1} parent=55 // pred_region
            %s720 = sshll.u32 1, 1
            %s721 = ssub.s32 %s720, 1
            loop: start=0, step=1, limit=1
            $region245: #{_decoder_step.1} parent=243 // loop_pre_header
              _
            $region246: #{_decoder_step.1} parent=243 // loop_header
              %s723 = sphi 0, %s727
              %p724 = scmp.ge.s32.totalorder %s723, 1
              %s728 = sphi %s709, %s709
              %s729 = sphi %s710, %s710
            $region247: #{_decoder_step.1} parent=243 // loop_header_branch
              %726 = sbr.rel (%p724) target = $region251
            $region248: #{_decoder_step.1} parent=243 // loop_body
              %v730 = vld [vmem:[%s728] sm:%s721]
              %731 = vst [vmem:[%s729] sm:%s721] %v730
            $region249: #{_decoder_step.1} parent=243 // loop_footer
              %s727 = sadd.s32 1, %s723
            $region250: #{_decoder_step.1} parent=243 // loop_footer_branch
              %722 = sbr.rel target = $region246
            $region251: #{_decoder_step.1} parent=243 // loop_exit
              _
          $region244: #{_decoder_step.1} parent=55 // pred_fallthru
            _
          // Predicated region
          $region263: #{_decoder_step.1} parent=55 // pred_check
            _
          $region264: #{_decoder_step.1} parent=55 // pred_check_branch
            %756 = sbr.rel (0) target = $region266
          $region265: #{_decoder_step.1} parent=55 // pred_region
            %757 = vsyncadd %s711, 16
          $region266: #{_decoder_step.1} parent=55 // pred_fallthru
            _
          %s758 = sld [smem:[#allocation5 + $0x7]]
          %s759 = scalar_lea.vmem %s1, %s758
          %s760 = scalar_lea.vmem [#allocation2], 7
          %s761 = scalar_lea.sflag [#allocation3], 7
          %p763 = scmp.lt.u32.totalorder 1, 8
          %p764 = pneg %p763
          // Predicated region
          $region267: #{_decoder_step.1} parent=55 // pred_check
            _
          $region268: #{_decoder_step.1} parent=55 // pred_check_branch
            %766 = sbr.rel (%p763) target = $region270
          $region269: #{_decoder_step.1} parent=55 // pred_region
            %s782 = sand.u32 1, 7
            %p783 = scmp.eq.s32.totalorder %s782, 0
            %p784 = pneg %p783
            // Predicated region
            $region282: #{_decoder_step.1} parent=269 // pred_check
              _
            $region283: #{_decoder_step.1} parent=269 // pred_check_branch
              %786 = sbr.rel (%p783) target = $region285
            $region284: #{_decoder_step.1} parent=269 // pred_region
              %s787 = sand.u32 1, 7
              %s788 = ssub.s32 1, %s787
              %s789 = scalar_lea.vmem %s759, %s788
              %s790 = ssub.s32 1, %s787
              %s791 = scalar_lea.vmem %s760, %s790 [#allocation2]
              %s792 = sshll.u32 1, %s787
              %s793 = ssub.s32 %s792, 1
              loop: start=0, step=1, limit=1
              $region286: #{_decoder_step.1} parent=284 // loop_pre_header
                _
              $region287: #{_decoder_step.1} parent=284 // loop_header
                %s795 = sphi 0, %s799
                %p796 = scmp.ge.s32.totalorder %s795, 1
                %s800 = sphi %s789, %s789
                %s801 = sphi %s791, %s791
              $region288: #{_decoder_step.1} parent=284 // loop_header_branch
                %798 = sbr.rel (%p796) target = $region292
              $region289: #{_decoder_step.1} parent=284 // loop_body
                %v802 = vld [vmem:[%s800] sm:%s793]
                %803 = vst [vmem:[%s801] sm:%s793] %v802
              $region290: #{_decoder_step.1} parent=284 // loop_footer
                %s799 = sadd.s32 1, %s795
              $region291: #{_decoder_step.1} parent=284 // loop_footer_branch
                %794 = sbr.rel target = $region287
              $region292: #{_decoder_step.1} parent=284 // loop_exit
                _
            $region285: #{_decoder_step.1} parent=269 // pred_fallthru
              _
          $region270: #{_decoder_step.1} parent=55 // pred_fallthru
            _
          // Predicated region
          $region271: #{_decoder_step.1} parent=55 // pred_check
            %p767 = pneg %p763
          $region272: #{_decoder_step.1} parent=55 // pred_check_branch
            %769 = sbr.rel (%p767) target = $region274
          $region273: #{_decoder_step.1} parent=55 // pred_region
            %s770 = sshll.u32 1, 1
            %s771 = ssub.s32 %s770, 1
            loop: start=0, step=1, limit=1
            $region275: #{_decoder_step.1} parent=273 // loop_pre_header
              _
            $region276: #{_decoder_step.1} parent=273 // loop_header
              %s773 = sphi 0, %s777
              %p774 = scmp.ge.s32.totalorder %s773, 1
              %s778 = sphi %s759, %s759
              %s779 = sphi %s760, %s760
            $region277: #{_decoder_step.1} parent=273 // loop_header_branch
              %776 = sbr.rel (%p774) target = $region281
            $region278: #{_decoder_step.1} parent=273 // loop_body
              %v780 = vld [vmem:[%s778] sm:%s771]
              %781 = vst [vmem:[%s779] sm:%s771] %v780
            $region279: #{_decoder_step.1} parent=273 // loop_footer
              %s777 = sadd.s32 1, %s773
            $region280: #{_decoder_step.1} parent=273 // loop_footer_branch
              %772 = sbr.rel target = $region276
            $region281: #{_decoder_step.1} parent=273 // loop_exit
              _
          $region274: #{_decoder_step.1} parent=55 // pred_fallthru
            _
          // Predicated region
          $region293: #{_decoder_step.1} parent=55 // pred_check
            _
          $region294: #{_decoder_step.1} parent=55 // pred_check_branch
            %806 = sbr.rel (0) target = $region296
          $region295: #{_decoder_step.1} parent=55 // pred_region
            %807 = vsyncadd %s761, 16
          $region296: #{_decoder_step.1} parent=55 // pred_fallthru
            _
          %s808 = smul.u32 1, 1
          %s809 = sshll.u32 %s808, 4
          %810 = dma.done [#allocation3], %s809
          %s811 = sshll.u32 %s808, 4
          %812 = dma.done %s461, %s811
          %s813 = sshll.u32 %s808, 4
          %814 = dma.done %s511, %s813
          %s815 = sshll.u32 %s808, 4
          %816 = dma.done %s561, %s815
          %s817 = sshll.u32 %s808, 4
          %818 = dma.done %s611, %s817
          %s819 = sshll.u32 %s808, 4
          %820 = dma.done %s661, %s819
          %s821 = sshll.u32 %s808, 4
          %822 = dma.done %s711, %s821
          %s823 = sshll.u32 %s808, 4
          %824 = dma.done %s761, %s823
          %v825 = vld [vmem:[#allocation2] sm:$0xff]
          %v826 = vmax.f32 %v825, 0.0
          %827 = vst [vmem:[#allocation2] sm:$0xff] %v826
        $region56: #{_decoder_step.1} parent=43 // pred_fallthru
          _
        %v828 = vld [vmem:[#allocation2] sm:$0xff]
        %v829 = vld [vmem:[%s397] sm:$0xff]
        %v830 = vld [vmem:[%s401] sm:$0xff]
        %v831 = vld [vmem:[%s340] sm:$0xff]
        %v832 = vld [vmem:[%s340 + $0x8] sm:$0xff]
        %v833 = vld [vmem:[%s340 + $0x10] sm:$0xff]
        %v834 = vld [vmem:[%s340 + $0x18] sm:$0xff]
        %v835 = vld [vmem:[%s340 + $0x20] sm:$0xff]
        %v836 = vld [vmem:[%s340 + $0x28] sm:$0xff]
        %v837 = vld [vmem:[%s340 + $0x30] sm:$0xff]
        %v838 = vld [vmem:[%s340 + $0x38] sm:$0xff]
        %v839 = vld [vmem:[%s340 + $0x40] sm:$0xff]
        %v840 = vld [vmem:[%s340 + $0x48] sm:$0xff]
        %v841 = vld [vmem:[%s340 + $0x50] sm:$0xff]
        %v842 = vld [vmem:[%s340 + $0x58] sm:$0xff]
        %v843 = vld [vmem:[%s340 + $0x60] sm:$0xff]
        %v844 = vld [vmem:[%s340 + $0x68] sm:$0xff]
        %v845 = vld [vmem:[%s340 + $0x70] sm:$0xff]
        %v846 = vld [vmem:[%s340 + $0x78] sm:$0xff]
        %v847 = vld [vmem:[%s340 + $0x80] sm:$0xff]
        %v848 = vld [vmem:[%s340 + $0x88] sm:$0xff]
        %v849 = vld [vmem:[%s340 + $0x90] sm:$0xff]
        %v850 = vld [vmem:[%s340 + $0x98] sm:$0xff]
        %v851 = vld [vmem:[%s340 + $0xa0] sm:$0xff]
        %v852 = vld [vmem:[%s340 + $0xa8] sm:$0xff]
        %v853 = vld [vmem:[%s340 + $0xb0] sm:$0xff]
        %v854 = vld [vmem:[%s340 + $0xb8] sm:$0xff]
        %v855 = vld [vmem:[%s340 + $0xc0] sm:$0xff]
        %v856 = vld [vmem:[%s340 + $0xc8] sm:$0xff]
        %v857 = vld [vmem:[%s340 + $0xd0] sm:$0xff]
        %v858 = vld [vmem:[%s340 + $0xd8] sm:$0xff]
        %v859 = vld [vmem:[%s340 + $0xe0] sm:$0xff]
        %v860 = vld [vmem:[%s340 + $0xe8] sm:$0xff]
        %v861 = vld [vmem:[%s340 + $0xf0] sm:$0xff]
        %v862 = vld [vmem:[%s340 + $0xf8] sm:$0xff]
        %v863 = vld [vmem:[%s340 + $0x100] sm:$0xff]
        %v864 = vld [vmem:[%s340 + $0x108] sm:$0xff]
        %v865 = vld [vmem:[%s340 + $0x110] sm:$0xff]
        %v866 = vld [vmem:[%s340 + $0x118] sm:$0xff]
        %v867 = vld [vmem:[%s340 + $0x120] sm:$0xff]
        %v868 = vld [vmem:[%s340 + $0x128] sm:$0xff]
        %v869 = vld [vmem:[%s340 + $0x130] sm:$0xff]
        %v870 = vld [vmem:[%s340 + $0x138] sm:$0xff]
        %v871 = vld [vmem:[%s340 + $0x140] sm:$0xff]
        %v872 = vld [vmem:[%s340 + $0x148] sm:$0xff]
        %v873 = vld [vmem:[%s340 + $0x150] sm:$0xff]
        %v874 = vld [vmem:[%s340 + $0x158] sm:$0xff]
        %v875 = vld [vmem:[%s340 + $0x160] sm:$0xff]
        %v876 = vld [vmem:[%s340 + $0x168] sm:$0xff]
        %v877 = vld [vmem:[%s340 + $0x170] sm:$0xff]
        %v878 = vld [vmem:[%s340 + $0x178] sm:$0xff]
        %v879 = vld [vmem:[%s340 + $0x180] sm:$0xff]
        %v880 = vld [vmem:[%s340 + $0x188] sm:$0xff]
        %v881 = vld [vmem:[%s340 + $0x190] sm:$0xff]
        %v882 = vld [vmem:[%s340 + $0x198] sm:$0xff]
        %v883 = vld [vmem:[%s340 + $0x1a0] sm:$0xff]
        %v884 = vld [vmem:[%s340 + $0x1a8] sm:$0xff]
        %v885 = vld [vmem:[%s340 + $0x1b0] sm:$0xff]
        %v886 = vld [vmem:[%s340 + $0x1b8] sm:$0xff]
        %v887 = vld [vmem:[%s340 + $0x1c0] sm:$0xff]
        %v888 = vld [vmem:[%s340 + $0x1c8] sm:$0xff]
        %v889 = vld [vmem:[%s340 + $0x1d0] sm:$0xff]
        %v890 = vld [vmem:[%s340 + $0x1d8] sm:$0xff]
        %v891 = vld [vmem:[%s340 + $0x1e0] sm:$0xff]
        %v892 = vld [vmem:[%s340 + $0x1e8] sm:$0xff]
        %v893 = vld [vmem:[%s340 + $0x1f0] sm:$0xff]
        %v894 = vld [vmem:[%s340 + $0x1f8] sm:$0xff]
        %v895 = vld [vmem:[%s340 + $0x200] sm:$0xff]
        %v896 = vld [vmem:[%s340 + $0x208] sm:$0xff]
        %v897 = vld [vmem:[%s340 + $0x210] sm:$0xff]
        %v898 = vld [vmem:[%s340 + $0x218] sm:$0xff]
        %v899 = vld [vmem:[%s340 + $0x220] sm:$0xff]
        %v900 = vld [vmem:[%s340 + $0x228] sm:$0xff]
        %v901 = vld [vmem:[%s340 + $0x230] sm:$0xff]
        %v902 = vld [vmem:[%s340 + $0x238] sm:$0xff]
        %v903 = vld [vmem:[%s340 + $0x240] sm:$0xff]
        %v904 = vld [vmem:[%s340 + $0x248] sm:$0xff]
        %v905 = vld [vmem:[%s340 + $0x250] sm:$0xff]
        %v906 = vld [vmem:[%s340 + $0x258] sm:$0xff]
        %v907 = vld [vmem:[%s340 + $0x260] sm:$0xff]
        %v908 = vld [vmem:[%s340 + $0x268] sm:$0xff]
        %v909 = vld [vmem:[%s340 + $0x270] sm:$0xff]
        %v910 = vld [vmem:[%s340 + $0x278] sm:$0xff]
        %v911 = vld [vmem:[%s340 + $0x280] sm:$0xff]
        %v912 = vld [vmem:[%s340 + $0x288] sm:$0xff]
        %v913 = vld [vmem:[%s340 + $0x290] sm:$0xff]
        %v914 = vld [vmem:[%s340 + $0x298] sm:$0xff]
        %v915 = vld [vmem:[%s340 + $0x2a0] sm:$0xff]
        %v916 = vld [vmem:[%s340 + $0x2a8] sm:$0xff]
        %v917 = vld [vmem:[%s340 + $0x2b0] sm:$0xff]
        %v918 = vld [vmem:[%s340 + $0x2b8] sm:$0xff]
        %v919 = vld [vmem:[%s340 + $0x2c0] sm:$0xff]
        %v920 = vld [vmem:[%s340 + $0x2c8] sm:$0xff]
        %v921 = vld [vmem:[%s340 + $0x2d0] sm:$0xff]
        %v922 = vld [vmem:[%s340 + $0x2d8] sm:$0xff]
        %v923 = vld [vmem:[%s340 + $0x2e0] sm:$0xff]
        %v924 = vld [vmem:[%s340 + $0x2e8] sm:$0xff]
        %v925 = vld [vmem:[%s340 + $0x2f0] sm:$0xff]
        %v926 = vld [vmem:[%s340 + $0x2f8] sm:$0xff]
        %v927 = vld [vmem:[%s340 + $0x300] sm:$0xff]
        %v928 = vld [vmem:[%s340 + $0x308] sm:$0xff]
        %v929 = vld [vmem:[%s340 + $0x310] sm:$0xff]
        %v930 = vld [vmem:[%s340 + $0x318] sm:$0xff]
        %v931 = vld [vmem:[%s340 + $0x320] sm:$0xff]
        %v932 = vld [vmem:[%s340 + $0x328] sm:$0xff]
        %v933 = vld [vmem:[%s340 + $0x330] sm:$0xff]
        %v934 = vld [vmem:[%s340 + $0x338] sm:$0xff]
        %v935 = vld [vmem:[%s340 + $0x340] sm:$0xff]
        %v936 = vld [vmem:[%s340 + $0x348] sm:$0xff]
        %v937 = vld [vmem:[%s340 + $0x350] sm:$0xff]
        %v938 = vld [vmem:[%s340 + $0x358] sm:$0xff]
        %v939 = vld [vmem:[%s340 + $0x360] sm:$0xff]
        %v940 = vld [vmem:[%s340 + $0x368] sm:$0xff]
        %v941 = vld [vmem:[%s340 + $0x370] sm:$0xff]
        %v942 = vld [vmem:[%s340 + $0x378] sm:$0xff]
        %v943 = vld [vmem:[%s340 + $0x380] sm:$0xff]
        %v944 = vld [vmem:[%s340 + $0x388] sm:$0xff]
        %v945 = vld [vmem:[%s340 + $0x390] sm:$0xff]
        %v946 = vld [vmem:[%s340 + $0x398] sm:$0xff]
        %v947 = vld [vmem:[%s340 + $0x3a0] sm:$0xff]
        %v948 = vld [vmem:[%s340 + $0x3a8] sm:$0xff]
        %v949 = vld [vmem:[%s340 + $0x3b0] sm:$0xff]
        %v950 = vld [vmem:[%s340 + $0x3b8] sm:$0xff]
        %v951 = vld [vmem:[%s340 + $0x3c0] sm:$0xff]
        %v952 = vld [vmem:[%s340 + $0x3c8] sm:$0xff]
        %v953 = vld [vmem:[%s340 + $0x3d0] sm:$0xff]
        %v954 = vld [vmem:[%s340 + $0x3d8] sm:$0xff]
        %v955 = vld [vmem:[%s340 + $0x3e0] sm:$0xff]
        %v956 = vld [vmem:[%s340 + $0x3e8] sm:$0xff]
        %v957 = vld [vmem:[%s340 + $0x3f0] sm:$0xff]
        %v958 = vld [vmem:[%s340 + $0x3f8] sm:$0xff]
        %v959 = vld [vmem:[%s405] sm:$0xf]
        %v961 = vlaneseq
        %v962 = vshrl.u32 %v961, 7
        %v963 = vsub.s32 0, %v962
        %v964 = vrot.slane %v959, %v963
        %v965 = vlaneseq
        %v966 = vshrl.u32 %v965, 7
        %v967 = vsub.s32 1, %v966
        %v968 = vrot.slane %v959, %v967
        %v969 = vlaneseq
        %v970 = vshrl.u32 %v969, 7
        %v971 = vsub.s32 2, %v970
        %v972 = vrot.slane %v959, %v971
        %v973 = vlaneseq
        %v974 = vshrl.u32 %v973, 7
        %v975 = vsub.s32 3, %v974
        %v976 = vrot.slane %v959, %v975
        %981 = vmatprep.subr.mxu0 %v892
        %982 = vmatpush1.msra.mxu0 %v891
        %983 = vmatprep.subr.mxu0 %v888
        %984 = vmatpush1.msra.mxu0 %v887
        %985 = vmatprep.subr.mxu0 %v884
        %986 = vmatpush1.msra.mxu0 %v883
        %987 = vmatprep.subr.mxu0 %v880
        %988 = vmatpush1.msra.mxu0 %v879
        %989 = vmatprep.subr.mxu0 %v876
        %990 = vmatpush1.msra.mxu0 %v875
        %991 = vmatprep.subr.mxu0 %v872
        %992 = vmatpush1.msra.mxu0 %v871
        %993 = vmatprep.subr.mxu0 %v868
        %994 = vmatpush1.msra.mxu0 %v867
        %995 = vmatprep.subr.mxu0 %v864
        %996 = vmatpush1.msra.mxu0 %v863
        %997 = vmatprep.subr.mxu0 %v860
        %998 = vmatpush1.msra.mxu0 %v859
        %999 = vmatprep.subr.mxu0 %v856
        %1000 = vmatpush1.msra.mxu0 %v855
        %1001 = vmatprep.subr.mxu0 %v852
        %1002 = vmatpush1.msra.mxu0 %v851
        %1003 = vmatprep.subr.mxu0 %v848
        %1004 = vmatpush1.msra.mxu0 %v847
        %1005 = vmatprep.subr.mxu0 %v844
        %1006 = vmatpush1.msra.mxu0 %v843
        %1007 = vmatprep.subr.mxu0 %v840
        %1008 = vmatpush1.msra.mxu0 %v839
        %1009 = vmatprep.subr.mxu0 %v836
        %1010 = vmatpush1.msra.mxu0 %v835
        %1011 = vmatprep.subr.mxu0 %v832
        %1012 = vmatpush1.msra.mxu0 %v831
        %1013 = vmatprep.subr.mxu0 %v956
        %1014 = vmatpush2.msra.mxu0 %v955
        %1015 = vmatprep.subr.mxu0 %v952
        %1016 = vmatpush2.msra.mxu0 %v951
        %1017 = vmatprep.subr.mxu0 %v948
        %1018 = vmatpush2.msra.mxu0 %v947
        %1019 = vmatprep.subr.mxu0 %v944
        %1020 = vmatpush2.msra.mxu0 %v943
        %1021 = vmatprep.subr.mxu0 %v940
        %1022 = vmatpush2.msra.mxu0 %v939
        %1023 = vmatprep.subr.mxu0 %v936
        %1024 = vmatpush2.msra.mxu0 %v935
        %1025 = vmatprep.subr.mxu0 %v932
        %1026 = vmatpush2.msra.mxu0 %v931
        %1027 = vmatprep.subr.mxu0 %v928
        %1028 = vmatpush2.msra.mxu0 %v927
        %1029 = vmatprep.subr.mxu0 %v924
        %1030 = vmatpush2.msra.mxu0 %v923
        %1031 = vmatprep.subr.mxu0 %v920
        %1032 = vmatpush2.msra.mxu0 %v919
        %1033 = vmatprep.subr.mxu0 %v916
        %1034 = vmatpush2.msra.mxu0 %v915
        %1035 = vmatprep.subr.mxu0 %v912
        %1036 = vmatpush2.msra.mxu0 %v911
        %1037 = vmatprep.subr.mxu0 %v908
        %1038 = vmatpush2.msra.mxu0 %v907
        %1039 = vmatprep.subr.mxu0 %v904
        %1040 = vmatpush2.msra.mxu0 %v903
        %1041 = vmatprep.subr.mxu0 %v900
        %1042 = vmatpush2.msra.mxu0 %v899
        %1043 = vmatprep.subr.mxu0 %v896
        %1044 = vmatpush2.msra.mxu0 %v895
        %1045 = vmatprep.mubr.f32.mxu0 %v829
        %1046 = vmatmul.mubr.f32.gmra.mxu0 %v828
        %v1047 = vpop.f32.mrf.mxu0
        %v1048 = vadd.f32 %v964, %v1047
        %v1049 = vpop.f32.mrf.mxu0
        %v1050 = vadd.f32 %v968, %v1049
        %1051 = vdwg.mxu0
        %1052 = vmatprep.subr.mxu0 %v894
        %1053 = vmatpush1.msra.mxu0 %v893
        %1054 = vmatprep.subr.mxu0 %v890
        %1055 = vmatpush1.msra.mxu0 %v889
        %1056 = vmatprep.subr.mxu0 %v886
        %1057 = vmatpush1.msra.mxu0 %v885
        %1058 = vmatprep.subr.mxu0 %v882
        %1059 = vmatpush1.msra.mxu0 %v881
        %1060 = vmatprep.subr.mxu0 %v878
        %1061 = vmatpush1.msra.mxu0 %v877
        %1062 = vmatprep.subr.mxu0 %v874
        %1063 = vmatpush1.msra.mxu0 %v873
        %1064 = vmatprep.subr.mxu0 %v870
        %1065 = vmatpush1.msra.mxu0 %v869
        %1066 = vmatprep.subr.mxu0 %v866
        %1067 = vmatpush1.msra.mxu0 %v865
        %1068 = vmatprep.subr.mxu0 %v862
        %1069 = vmatpush1.msra.mxu0 %v861
        %1070 = vmatprep.subr.mxu0 %v858
        %1071 = vmatpush1.msra.mxu0 %v857
        %1072 = vmatprep.subr.mxu0 %v854
        %1073 = vmatpush1.msra.mxu0 %v853
        %1074 = vmatprep.subr.mxu0 %v850
        %1075 = vmatpush1.msra.mxu0 %v849
        %1076 = vmatprep.subr.mxu0 %v846
        %1077 = vmatpush1.msra.mxu0 %v845
        %1078 = vmatprep.subr.mxu0 %v842
        %1079 = vmatpush1.msra.mxu0 %v841
        %1080 = vmatprep.subr.mxu0 %v838
        %1081 = vmatpush1.msra.mxu0 %v837
        %1082 = vmatprep.subr.mxu0 %v834
        %1083 = vmatpush1.msra.mxu0 %v833
        %1084 = vmatprep.subr.mxu0 %v958
        %1085 = vmatpush2.msra.mxu0 %v957
        %1086 = vmatprep.subr.mxu0 %v954
        %1087 = vmatpush2.msra.mxu0 %v953
        %1088 = vmatprep.subr.mxu0 %v950
        %1089 = vmatpush2.msra.mxu0 %v949
        %1090 = vmatprep.subr.mxu0 %v946
        %1091 = vmatpush2.msra.mxu0 %v945
        %1092 = vmatprep.subr.mxu0 %v942
        %1093 = vmatpush2.msra.mxu0 %v941
        %1094 = vmatprep.subr.mxu0 %v938
        %1095 = vmatpush2.msra.mxu0 %v937
        %1096 = vmatprep.subr.mxu0 %v934
        %1097 = vmatpush2.msra.mxu0 %v933
        %1098 = vmatprep.subr.mxu0 %v930
        %1099 = vmatpush2.msra.mxu0 %v929
        %1100 = vmatprep.subr.mxu0 %v926
        %1101 = vmatpush2.msra.mxu0 %v925
        %1102 = vmatprep.subr.mxu0 %v922
        %1103 = vmatpush2.msra.mxu0 %v921
        %1104 = vmatprep.subr.mxu0 %v918
        %1105 = vmatpush2.msra.mxu0 %v917
        %1106 = vmatprep.subr.mxu0 %v914
        %1107 = vmatpush2.msra.mxu0 %v913
        %1108 = vmatprep.subr.mxu0 %v910
        %1109 = vmatpush2.msra.mxu0 %v909
        %1110 = vmatprep.subr.mxu0 %v906
        %1111 = vmatpush2.msra.mxu0 %v905
        %1112 = vmatprep.subr.mxu0 %v902
        %1113 = vmatpush2.msra.mxu0 %v901
        %1114 = vmatprep.subr.mxu0 %v898
        %1115 = vmatpush2.msra.mxu0 %v897
        %1116 = vmatprep.mubr.f32.mxu0 %v829
        %1117 = vmatmul.mubr.f32.gmra.mxu0 %v828
        %v1118 = vpop.f32.mrf.mxu0
        %v1119 = vadd.f32 %v972, %v1118
        %v1120 = vpop.f32.mrf.mxu0
        %v1121 = vadd.f32 %v976, %v1120
        %1122 = vdwg.mxu0
        %v1123 = vmul.f32 %v1048, 0.5
        %v1124 = vtanh.pop %v1123
        %v1125 = vadd.f32 %v1124, 1.0
        %v1126 = vmul.f32 %v1125, 0.5
        %v1127 = vmul.f32 %v1050, 0.5
        %v1128 = vtanh.pop %v1127
        %v1129 = vadd.f32 %v1128, 1.0
        %v1130 = vmul.f32 %v1129, 0.5
        %v1131 = vtanh.pop %v1119
        %v1132 = vmul.f32 %v1121, 0.5
        %v1133 = vtanh.pop %v1132
        %v1134 = vadd.f32 %v1133, 1.0
        %v1135 = vmul.f32 %v1134, 0.5
        %v1136 = vmul.f32 %v1130, %v830
        %v1137 = vmul.f32 %v1126, %v1131
        %v1138 = vadd.f32 %v1136, %v1137
        %v1139 = vtanh.pop %v1138
        %v1140 = vmul.f32 %v1135, %v1139
        %1141 = vst [vmem:[%s386] sm:$0xff] %v1140
        %1142 = vst [vmem:[%s393] sm:$0xff] %v1138
        %1143 = vst [vmem:[#allocation2] sm:$0xff] %v1140
        %p1144 = scmp.eq.s32.totalorder %s38, 1
        // Predicated region
        $region297: #{_decoder_step.1} parent=43 // pred_check
          %p1145 = pneg %p1144
        $region298: #{_decoder_step.1} parent=43 // pred_check_branch
          %1147 = sbr.rel (%p1145) target = $region300
        $region299: #{_decoder_step.1} parent=43 // pred_region
          %v1148 = vld [vmem:[#allocation9] sm:$0xff]
          %v1149 = vld [vmem:[#allocation9 + $0x8] sm:$0xff]
          %v1150 = vld [vmem:[#allocation9 + $0x10] sm:$0xff]
          %v1151 = vld [vmem:[#allocation9 + $0x18] sm:$0xff]
          %v1152 = vld [vmem:[#allocation9 + $0x20] sm:$0xff]
          %v1153 = vld [vmem:[#allocation9 + $0x28] sm:$0xff]
          %v1154 = vld [vmem:[#allocation9 + $0x30] sm:$0xff]
          %v1155 = vld [vmem:[#allocation9 + $0x38] sm:$0xff]
          %v1156 = vld [vmem:[#allocation9 + $0x40] sm:$0xff]
          %v1157 = vld [vmem:[#allocation9 + $0x48] sm:$0xff]
          %v1158 = vld [vmem:[#allocation9 + $0x50] sm:$0xff]
          %v1159 = vld [vmem:[#allocation9 + $0x58] sm:$0xff]
          %v1160 = vld [vmem:[#allocation9 + $0x60] sm:$0xff]
          %v1161 = vld [vmem:[#allocation9 + $0x68] sm:$0xff]
          %v1162 = vld [vmem:[#allocation9 + $0x70] sm:$0xff]
          %v1163 = vld [vmem:[#allocation9 + $0x78] sm:$0xff]
          %v1164 = vld [vmem:[%s7] sm:$0x1]
          %v1166 = vlaneseq
          %v1167 = vshrl.u32 %v1166, 7
          %v1168 = vsub.s32 0, %v1167
          %v1169 = vrot.slane %v1164, %v1168
          %1171 = vmatprep.subr.mxu0 0.0
          %1172 = vmatpush1.msra.mxu0 %v1163
          %1173 = vmatprep.subr.mxu0 0.0
          %1174 = vmatpush1.msra.mxu0 %v1162
          %1175 = vmatprep.subr.mxu0 0.0
          %1176 = vmatpush1.msra.mxu0 %v1161
          %1177 = vmatprep.subr.mxu0 0.0
          %1178 = vmatpush1.msra.mxu0 %v1160
          %1179 = vmatprep.subr.mxu0 0.0
          %1180 = vmatpush1.msra.mxu0 %v1159
          %1181 = vmatprep.subr.mxu0 0.0
          %1182 = vmatpush1.msra.mxu0 %v1158
          %1183 = vmatprep.subr.mxu0 0.0
          %1184 = vmatpush1.msra.mxu0 %v1157
          %1185 = vmatprep.subr.mxu0 0.0
          %1186 = vmatpush1.msra.mxu0 %v1156
          %1187 = vmatprep.subr.mxu0 0.0
          %1188 = vmatpush1.msra.mxu0 %v1155
          %1189 = vmatprep.subr.mxu0 0.0
          %1190 = vmatpush1.msra.mxu0 %v1154
          %1191 = vmatprep.subr.mxu0 0.0
          %1192 = vmatpush1.msra.mxu0 %v1153
          %1193 = vmatprep.subr.mxu0 0.0
          %1194 = vmatpush1.msra.mxu0 %v1152
          %1195 = vmatprep.subr.mxu0 0.0
          %1196 = vmatpush1.msra.mxu0 %v1151
          %1197 = vmatprep.subr.mxu0 0.0
          %1198 = vmatpush1.msra.mxu0 %v1150
          %1199 = vmatprep.subr.mxu0 0.0
          %1200 = vmatpush1.msra.mxu0 %v1149
          %1201 = vmatprep.subr.mxu0 0.0
          %1202 = vmatpush1.msra.mxu0 %v1148
          %1203 = vmatprep.subr.mxu0 0.0
          %1204 = vmatpush2.msra.mxu0 0.0
          %1205 = vmatprep.subr.mxu0 0.0
          %1206 = vmatpush2.msra.mxu0 0.0
          %1207 = vmatprep.subr.mxu0 0.0
          %1208 = vmatpush2.msra.mxu0 0.0
          %1209 = vmatprep.subr.mxu0 0.0
          %1210 = vmatpush2.msra.mxu0 0.0
          %1211 = vmatprep.subr.mxu0 0.0
          %1212 = vmatpush2.msra.mxu0 0.0
          %1213 = vmatprep.subr.mxu0 0.0
          %1214 = vmatpush2.msra.mxu0 0.0
          %1215 = vmatprep.subr.mxu0 0.0
          %1216 = vmatpush2.msra.mxu0 0.0
          %1217 = vmatprep.subr.mxu0 0.0
          %1218 = vmatpush2.msra.mxu0 0.0
          %1219 = vmatprep.subr.mxu0 0.0
          %1220 = vmatpush2.msra.mxu0 0.0
          %1221 = vmatprep.subr.mxu0 0.0
          %1222 = vmatpush2.msra.mxu0 0.0
          %1223 = vmatprep.subr.mxu0 0.0
          %1224 = vmatpush2.msra.mxu0 0.0
          %1225 = vmatprep.subr.mxu0 0.0
          %1226 = vmatpush2.msra.mxu0 0.0
          %1227 = vmatprep.subr.mxu0 0.0
          %1228 = vmatpush2.msra.mxu0 0.0
          %1229 = vmatprep.subr.mxu0 0.0
          %1230 = vmatpush2.msra.mxu0 0.0
          %1231 = vmatprep.subr.mxu0 0.0
          %1232 = vmatpush2.msra.mxu0 0.0
          %1233 = vmatprep.subr.mxu0 0.0
          %1234 = vmatpush2.msra.mxu0 0.0
          %1235 = vmatprep.mubr.f32.mxu0 0.0
          %1236 = vmatmul.mubr.f32.gmra.mxu0 %v1140
          %v1237 = vpop.f32.mrf.mxu0
          %v1238 = vadd.f32 %v1169, %v1237
          %v1239 = vpop.f32.mrf.mxu0
          %1240 = vdwg.mxu0
          %1241 = vmax.xlane.f32.xlu0 %v1238
          %v1242 = vpop.xlane.xlu0 %1241
          %v1243 = vsub.f32 %v1238, %v1242
          %v1244 = vmul.f32 %v1243, 1.442695
          %v1245 = vpow.pop %v1244
          %1246 = vadd.xlane.f32.xlu0 %v1245
          %v1247 = vpop.xlane.xlu0 %1246
          %v1248 = vlog2.pop %v1247
          %v1249 = vmul.f32 %v1248, 0.6931472
          %v1250 = vadd.f32 %v1242, %v1249
          %v1251 = vsub.f32 %v1238, %v1250
          %1252 = vst [vmem:[%s8] sm:$0xff] %v1251
        $region300: #{_decoder_step.1} parent=43 // pred_fallthru
          _
        %s1253 = sand.u32 %s213, 1
        %s1254 = scalar_lea.sflag [#allocation8], %s1253
        %s1255 = sand.u32 %s213, 1
        %s1256 = smul.addr %s1255, 8
        %s1257 = scalar_lea.vmem [#allocation11], %s1256
        %s1258 = sand.u32 %s239, 1
        %s1259 = scalar_lea.sflag [#allocation13], %s1258
        %s1260 = sand.u32 %s239, 1
        %s1261 = smul.addr %s1260, 8
        %s1262 = scalar_lea.vmem [#allocation12], %s1261
        // Predicated region
        $region301: #{_decoder_step.1} parent=43 // pred_check
          %p1263 = pneg %p197
        $region302: #{_decoder_step.1} parent=43 // pred_check_branch
          %1265 = sbr.rel (%p1263) target = $region304
        $region303: #{_decoder_step.1} parent=43 // pred_region
          _
        $region304: #{_decoder_step.1} parent=43 // pred_fallthru
          _
        // Predicated region
        $region305: #{_decoder_step.1} parent=43 // pred_check
          %p1266 = pneg %p223
        $region306: #{_decoder_step.1} parent=43 // pred_check_branch
          %1268 = sbr.rel (%p1266) target = $region308
        $region307: #{_decoder_step.1} parent=43 // pred_region
          %s1270 = ssub.s32 128, 128
          %1271 = vsyncadd %s1254, %s1270
          %s1272 = smul.addr %s38, 128
          %s1273 = scalar_lea.hbm %s9, %s1272
          %s1275 = sshll.u32 %s1257, 4
          %s1276 = int_to_ptr.vmem [resolvable:$true] %s1275
          %1278 = dma.vmem_to_hbm [thread:$0]  %s1276, 128, %s1273, %s1254
        $region308: #{_decoder_step.1} parent=43 // pred_fallthru
          _
        // Predicated region
        $region309: #{_decoder_step.1} parent=43 // pred_check
          %p1279 = pneg %p249
        $region310: #{_decoder_step.1} parent=43 // pred_check_branch
          %1281 = sbr.rel (%p1279) target = $region312
        $region311: #{_decoder_step.1} parent=43 // pred_region
          %s1283 = ssub.s32 128, 128
          %1284 = vsyncadd %s1259, %s1283
          %s1285 = smul.addr %s38, 128
          %s1286 = scalar_lea.hbm %s10, %s1285
          %s1288 = sshll.u32 %s1262, 4
          %s1289 = int_to_ptr.vmem [resolvable:$true] %s1288
          %1291 = dma.vmem_to_hbm [thread:$0]  %s1289, 128, %s1286, %s1259
        $region312: #{_decoder_step.1} parent=43 // pred_fallthru
          _
        // Predicated region
        $region313: #{_decoder_step.1} parent=43 // pred_check
          %p1292 = pneg %p197
        $region314: #{_decoder_step.1} parent=43 // pred_check_branch
          %1294 = sbr.rel (%p1292) target = $region316
        $region315: #{_decoder_step.1} parent=43 // pred_region
          _
        $region316: #{_decoder_step.1} parent=43 // pred_fallthru
          _
      $region44: #{_decoder_step.1} parent=5 // pred_fallthru
        _
      %p1295 = scmp.le.s32.totalorder 2, %s33
      // Predicated region
      $region317: #{_decoder_step.1} parent=5 // pred_check
        %p1296 = pneg %p1295
      $region318: #{_decoder_step.1} parent=5 // pred_check_branch
        %1298 = sbr.rel (%p1296) target = $region320
      $region319: #{_decoder_step.1} parent=5 // pred_region
        %s1299 = ssub.s32 %s33, 2
        // Predicated region
        $region321: #{_decoder_step.1} parent=319 // pred_check
          %p1300 = pneg %p229
        $region322: #{_decoder_step.1} parent=319 // pred_check_branch
          %1302 = sbr.rel (%p1300) target = $region324
        $region323: #{_decoder_step.1} parent=319 // pred_region
          %s1303 = sand.u32 %s214, 1
          %s1304 = scalar_lea.sflag [#allocation8], %s1303
          %s1305 = sand.u32 %s214, 1
          %s1306 = smul.addr %s1305, 8
          %s1307 = scalar_lea.vmem [#allocation11], %s1306
          %1308 = dma.done %s1304, 128
        $region324: #{_decoder_step.1} parent=319 // pred_fallthru
          _
        // Predicated region
        $region325: #{_decoder_step.1} parent=319 // pred_check
          %p1309 = pneg %p255
        $region326: #{_decoder_step.1} parent=319 // pred_check_branch
          %1311 = sbr.rel (%p1309) target = $region328
        $region327: #{_decoder_step.1} parent=319 // pred_region
          %s1312 = sand.u32 %s240, 1
          %s1313 = scalar_lea.sflag [#allocation13], %s1312
          %s1314 = sand.u32 %s240, 1
          %s1315 = smul.addr %s1314, 8
          %s1316 = scalar_lea.vmem [#allocation12], %s1315
          %1317 = dma.done %s1313, 128
        $region328: #{_decoder_step.1} parent=319 // pred_fallthru
          _
      $region320: #{_decoder_step.1} parent=5 // pred_fallthru
        _
    $region6: #{_decoder_step.1} parent=1 // loop_footer
      %s37 = sadd.s32 1, %s33
    $region7: #{_decoder_step.1} parent=1 // loop_footer_branch
      %32 = sbr.rel target = $region3
    $region8: #{_decoder_step.1} parent=1 // loop_exit
      _
    %1318 = vsyncpa [#allocation7], 1
    %s1319 = scalar_lea.sflag [#allocation7], 1
    %1320 = vsyncpa %s1319, 1
    %1321 = vsyncpa [#allocation10], 1
    %1322 = vsyncpa [#allocation8], 1
    %s1323 = scalar_lea.sflag [#allocation8], 1
    %1324 = vsyncpa %s1323, 1
    %1325 = vsyncpa [#allocation13], 1
    %s1326 = scalar_lea.sflag [#allocation13], 1
    %1327 = vsyncpa %s1326, 1
  %1328 = vsyncmov [#allocation3]
  %s1329 = vpop.sfrf %1328
  %p1330 = scmp.eq.s32.totalorder %s1329, 0
  %p1331 = pneg %p1330
  %1333 = shalt.err (%p1331)
  %s1334 = scalar_lea.sflag [#allocation3], 1
  %1335 = vsyncmov %s1334
  %s1336 = vpop.sfrf %1335
  %p1337 = scmp.eq.s32.totalorder %s1336, 0
  %p1338 = pneg %p1337
  %1340 = shalt.err (%p1338)
  %s1341 = scalar_lea.sflag [#allocation3], 2
  %1342 = vsyncmov %s1341
  %s1343 = vpop.sfrf %1342
  %p1344 = scmp.eq.s32.totalorder %s1343, 0
  %p1345 = pneg %p1344
  %1347 = shalt.err (%p1345)
  %s1348 = scalar_lea.sflag [#allocation3], 3
  %1349 = vsyncmov %s1348
  %s1350 = vpop.sfrf %1349
  %p1351 = scmp.eq.s32.totalorder %s1350, 0
  %p1352 = pneg %p1351
  %1354 = shalt.err (%p1352)
  %s1355 = scalar_lea.sflag [#allocation3], 4
  %1356 = vsyncmov %s1355
  %s1357 = vpop.sfrf %1356
  %p1358 = scmp.eq.s32.totalorder %s1357, 0
  %p1359 = pneg %p1358
  %1361 = shalt.err (%p1359)
  %s1362 = scalar_lea.sflag [#allocation3], 5
  %1363 = vsyncmov %s1362
  %s1364 = vpop.sfrf %1363
  %p1365 = scmp.eq.s32.totalorder %s1364, 0
  %p1366 = pneg %p1365
  %1368 = shalt.err (%p1366)
  %s1369 = scalar_lea.sflag [#allocation3], 6
  %1370 = vsyncmov %s1369
  %s1371 = vpop.sfrf %1370
  %p1372 = scmp.eq.s32.totalorder %s1371, 0
  %p1373 = pneg %p1372
  %1375 = shalt.err (%p1373)
  %s1376 = scalar_lea.sflag [#allocation3], 7
  %1377 = vsyncmov %s1376
  %s1378 = vpop.sfrf %1377
  %p1379 = scmp.eq.s32.totalorder %s1378, 0
  %p1380 = pneg %p1379
  %1382 = shalt.err (%p1380)

</llo_original>
